<compile_context>
chip_gen: v7x
topology: tpu7x:2x2x1
jax: 0.10.0
libtpu: 0.0.40
codegen_flags: <defaults>
</compile_context>

<pallas_src>
import functools

import jax
import jax.numpy as jnp
from jax.experimental import pallas as pl

F32 = jnp.float32
BN_EPS = 1e-5
BN_BETA = 1e-4   # torch.nn.init.constant_(bn.bias, 0.0001), bn.weight = 1
OUT_PAD = 128    # lane-dense padded output width


# ------------------------------- fused kernel -------------------------------

def fused_causal_gcn_kernel(x_ref, idx_ref, wf_ref, wh_ref, wro_ref, v_ref,
                            out_ref, *, n, e, g, h, c, layers):
  x = x_ref[...]                                          # [N, F]

  # ---- packed index reads (one int32 slab)
  row_e1 = idx_ref[0:e, 0:1]                              # [E,1] source node
  col_e1 = idx_ref[0:e, 1:2]                              # [E,1] target node
  col_1e = idx_ref[e:e + 1, 0:e]                          # [1,E] target (lanes)
  batch_1n = idx_ref[e + 1:e + 2, 0:n]                    # [1,N] graph id

  # ---- fused x projections:  x @ [Wn1 | We1a | We1b]  + [bn1 | be1 | 0]
  proj = (jnp.dot(x, wf_ref[:, 0:3 * h], preferred_element_type=F32)
          + v_ref[0:1, 0:3 * h])                          # [N, 3H]
  hn = jnp.maximum(proj[:, 0:h], 0.0)                     # node-att hidden

  # ---- one-hot gather / scatter masks built in-register
  lane_en = jax.lax.broadcasted_iota(jnp.int32, (e, n), 1)
  m_row = (lane_en == row_e1).astype(F32)                 # [E,N] x[row] gather
  m_col = (lane_en == col_e1).astype(F32)                 # [E,N] x[col] gather
  sub_ne = jax.lax.broadcasted_iota(jnp.int32, (n, e), 0)
  m_dst = (sub_ne == col_1e).astype(F32)                  # [N,E] scatter->target

  # ---- edge-att hidden via ONE gather matmul: [m_row | m_col] @ [hr ; hc]
  gat = jnp.concatenate([m_row, m_col], axis=1)                              # [E,2N]
  hrc = jnp.concatenate([proj[:, h:2 * h], proj[:, 2 * h:3 * h]], axis=0)    # [2N,H]
  he = jnp.maximum(jnp.dot(gat, hrc, preferred_element_type=F32), 0.0)       # [E,H]

  # ---- 2-class softmax == sigmoid of logit difference (no cross-lane reduce
  #      over [.,2]; difference weights packed in the wrapper)
  def sigmoid(d):
    return 1.0 / (1.0 + jnp.exp(-d))

  node_d = jnp.sum(hn * v_ref[2:3, 0:h], axis=1, keepdims=True) + v_ref[1:2, 0:1]
  edge_d = jnp.sum(he * v_ref[3:4, 0:h], axis=1, keepdims=True) + v_ref[1:2, 1:2]
  att_c = sigmoid(node_d)                                 # [N,1] node att (ctx)
  att_o = 1.0 - att_c
  w_c = sigmoid(edge_d)                                   # [E,1] edge att (ctx)
  w_o = 1.0 - w_c

  # ---- block-diag normalized adjacency for both branches (one scatter matmul)
  weighted = jnp.concatenate([m_row * w_c, m_row * w_o], axis=1)             # [E,2N]
  adjw = jnp.dot(m_dst, weighted, preferred_element_type=F32)                # [N,2N]
  z_nn = jnp.zeros((n, n), F32)
  a0 = jnp.concatenate(
      [jnp.concatenate([adjw[:, 0:n], z_nn], axis=1),
       jnp.concatenate([z_nn, adjw[:, n:2 * n]], axis=1)], axis=0)           # [2N,2N]
  eye2 = (jax.lax.broadcasted_iota(jnp.int32, (2 * n, 2 * n), 0)
          == jax.lax.broadcasted_iota(jnp.int32, (2 * n, 2 * n), 1)).astype(F32)
  a0 = a0 + eye2                                          # self loops (weight 1)
  deg = jnp.sum(a0, axis=0, keepdims=True)                # [1,2N] source degree
  dinv = jnp.where(deg > 0.0, jax.lax.rsqrt(deg), 0.0)
  dinv_col = jnp.sum(eye2 * dinv, axis=1, keepdims=True)  # [2N,1], no transpose
  a_bd = (dinv_col * a0) * dinv                           # elementwise D^-1/2 A D^-1/2

  # ---- stacked GCN (context rows 0:N, objects rows N:2N)
  row_is_c = jax.lax.broadcasted_iota(jnp.int32, (2 * n, h), 0) < n

  def bn(v):  # BatchNorm1d, training mode, gamma=1, beta=BN_BETA
    mean = jnp.mean(v, axis=0, keepdims=True)
    var = jnp.mean((v - mean) ** 2, axis=0, keepdims=True)
    return (v - mean) * jax.lax.rsqrt(var + BN_EPS) + BN_BETA

  def bn_pair(v):  # per-branch statistics on the stacked block
    return jnp.concatenate([bn(v[0:n]), bn(v[n:2 * n])], axis=0)

  def gcn(v, w_cat, b_cat):
    full = jnp.dot(bn_pair(v), w_cat, preferred_element_type=F32)   # [2N,2H]
    xw = jnp.where(row_is_c, full[:, 0:h], full[:, h:2 * h])        # [2N,H]
    bsel = jnp.where(row_is_c, b_cat[:, 0:h], b_cat[:, h:2 * h])
    return jnp.maximum(
        jnp.dot(a_bd, xw, preferred_element_type=F32) + bsel, 0.0)

  feats = jnp.concatenate([att_c * x, att_o * x], axis=0)           # [2N,F]
  feats = gcn(feats, wf_ref[:, 3 * h:5 * h], v_ref[4:5, 0:2 * h])
  for l in range(layers):                                           # static unroll
    feats = gcn(feats, wh_ref[:, 2 * h * l:2 * h * (l + 1)],
                v_ref[5 + l:6 + l, 0:2 * h])

  # ---- global_add_pool for both branches
  pool = (jax.lax.broadcasted_iota(jnp.int32, (g, n), 0)
          == batch_1n).astype(F32)                                  # [G,N]
  xc_p = jnp.dot(pool, feats[0:n], preferred_element_type=F32)      # [G,H]
  xo_p = jnp.dot(pool, feats[n:2 * n], preferred_element_type=F32)  # [G,H]
  p_all = jnp.concatenate([xc_p, xo_p, xc_p + xo_p], axis=1)        # [G,3H]

  # ---- fused 3-head readout (block-diagonal weights built in the wrapper)
  h1 = jnp.maximum(
      jnp.dot(bn(p_all), wro_ref[:, 0:3 * h], preferred_element_type=F32)
      + v_ref[5 + layers:6 + layers, 0:3 * h], 0.0)                 # [G,3H]
  zz = (jnp.dot(bn(h1), wro_ref[:, 3 * h:3 * h + 3 * c],
                preferred_element_type=F32)
        + v_ref[6 + layers:7 + layers, 0:3 * c])                    # [G,3C]

  def lsm(v):
    m = jnp.max(v, axis=-1, keepdims=True)
    s = v - m
    return s - jnp.log(jnp.sum(jnp.exp(s), axis=-1, keepdims=True))

  res = jnp.concatenate([lsm(zz[:, 0:c]), lsm(zz[:, c:2 * c]),
                         lsm(zz[:, 2 * c:3 * c])], axis=1)          # [G,3C]
  # single lane-dense store (padded to 128 lanes, sliced in the wrapper)
  out_ref[...] = jnp.concatenate(
      [res, jnp.zeros((g, out_ref.shape[1] - 3 * c), F32)], axis=1)


# ------------------------------ pallas_call glue -----------------------------

def _full_spec(shape):
  nd = len(shape)
  return pl.BlockSpec(shape, lambda *_, nd=nd: (0,) * nd)


def _block_diag(mats):
  out_rows = []
  for i, m in enumerate(mats):
    row = [m if j == i else jnp.zeros((m.shape[0], mj.shape[1]), F32)
           for j, mj in enumerate(mats)]
    out_rows.append(jnp.concatenate(row, axis=1))
  return jnp.concatenate(out_rows, axis=0)


def causal_gcn_begin_forward(params, x, edge_index, batch, *, num_graphs):
  n, f = x.shape
  e = edge_index.shape[1]
  g = num_graphs

  we1, be1, we2, be2 = params["edge_att_mlp"]
  wn1, bn1, wn2, bn2 = params["node_att_mlp"]
  wc0, bc0 = params["context_conv"]
  wo0, bo0 = params["objects_conv"]
  convs_c, convs_o = params["convs_c"], params["convs_o"]
  layers = len(convs_c)
  h = wc0.shape[1]
  wc_r1, bc_r1, wc_r2, bc_r2 = params["readout_c"]
  wo_r1, bo_r1, wo_r2, bo_r2 = params["readout_o"]
  wco_r1, bco_r1, wco_r2, bco_r2 = params["readout_co"]
  c = wc_r2.shape[1]

  # ---- slab 1: F-input weights  [F, 5H] = [Wn1 | We1[:F] | We1[F:] | Wc0 | Wo0]
  w_f = jnp.concatenate([wn1, we1[:f], we1[f:], wc0, wo0], axis=1).astype(F32)
  # ---- slab 2: inner conv weights  [H, 2H*L], layer l = [Wcl | Wol]
  w_h = jnp.concatenate(
      [jnp.concatenate([convs_c[l][0], convs_o[l][0]], axis=1)
       for l in range(layers)], axis=1).astype(F32)
  # ---- slab 3: readout weights, block-diagonal  [3H, 3H + 3C]
  w_ro = jnp.concatenate([_block_diag([wc_r1, wo_r1, wco_r1]),
                          _block_diag([wc_r2, wo_r2, wco_r2])],
                         axis=1).astype(F32)

  # ---- slab 4: biases / small row-vectors  [7+L, 3H]
  bw = max(3 * h, 3 * c, 2)

  def vrow(v):
    v = v.reshape(1, -1).astype(F32)
    return jnp.pad(v, ((0, 0), (0, bw - v.shape[1])))

  rows = [
      vrow(jnp.concatenate([bn1, be1, jnp.zeros((1, h), F32)], axis=1)),   # 0
      vrow(jnp.concatenate([bn2[:, 0:1] - bn2[:, 1:2],
                            be2[:, 0:1] - be2[:, 1:2]], axis=1)),          # 1
      vrow(wn2[:, 0:1] - wn2[:, 1:2]),                                      # 2
      vrow(we2[:, 0:1] - we2[:, 1:2]),                                      # 3
      vrow(jnp.concatenate([bc0, bo0], axis=1)),                            # 4
  ]
  for l in range(layers):
    rows.append(vrow(jnp.concatenate([convs_c[l][1], convs_o[l][1]], axis=1)))
  rows.append(vrow(jnp.concatenate([bc_r1, bo_r1, bco_r1], axis=1)))
  rows.append(vrow(jnp.concatenate([bc_r2, bo_r2, bco_r2], axis=1)))
  v_slab = jnp.concatenate(rows, axis=0)                                    # [7+L, bw]

  # ---- slab 5: packed indices (row/col sublane-major, col/batch lane-major)
  row = edge_index[0].astype(jnp.int32)
  col = edge_index[1].astype(jnp.int32)
  wdt = max(e, n, 2)
  idx = jnp.zeros((e + 2, wdt), jnp.int32)
  idx = idx.at[:e, 0].set(row)
  idx = idx.at[:e, 1].set(col)
  idx = idx.at[e, :e].set(col)
  idx = idx.at[e + 1, :n].set(batch.astype(jnp.int32))

  args = (x.astype(F32), idx, w_f, w_h, w_ro, v_slab)
  kernel = functools.partial(fused_causal_gcn_kernel,
                             n=n, e=e, g=g, h=h, c=c, layers=layers)
  out = pl.pallas_call(
      kernel,
      out_shape=jax.ShapeDtypeStruct((g, OUT_PAD), F32),
      in_specs=[_full_spec(a.shape) for a in args],
      out_specs=_full_spec((g, OUT_PAD)),
  )(*args)
  return out[:, 0:c], out[:, c:2 * c], out[:, 2 * c:3 * c]


# ------------------------------ parameter init -------------------------------

def init_params(key, num_features, hidden, num_classes, layers):
  keys = iter(jax.random.split(key, 64))

  def lin(din, dout, scale=0.1):
    w = jax.random.normal(next(keys), (din, dout), F32) * scale
    b = jax.random.normal(next(keys), (1, dout), F32) * scale
    return w, b

  params = {}
  w1, b1 = lin(num_features * 2, hidden)
  w2, b2 = lin(hidden, 2)
  params["edge_att_mlp"] = (w1, b1, w2, b2)
  w1, b1 = lin(num_features, hidden)
  w2, b2 = lin(hidden, 2)
  params["node_att_mlp"] = (w1, b1, w2, b2)
  params["context_conv"] = lin(num_features, hidden)
  params["objects_conv"] = lin(num_features, hidden)
  params["convs_c"] = [lin(hidden, hidden) for _ in range(layers)]
  params["convs_o"] = [lin(hidden, hidden) for _ in range(layers)]
  for name in ("readout_c", "readout_o", "readout_co"):
    w1, b1 = lin(hidden, hidden)
    w2, b2 = lin(hidden, num_classes)
    params[name] = (w1, b1, w2, b2)
  return params


# ----------------------------------- main ------------------------------------

if __name__ == "__main__":
  key = jax.random.PRNGKey(0)
  NODES_PER_GRAPH, NUM_GRAPHS = 8, 2
  N = NODES_PER_GRAPH * NUM_GRAPHS
  NUM_FEATURES, HIDDEN, NUM_CLASSES, LAYERS = 8, 32, 4, 2

  kx, kp = jax.random.split(key)
  x = jax.random.normal(kx, (N, NUM_FEATURES), F32)

  # two disjoint ring graphs, both edge directions, no self loops
  src, dst = [], []
  for gidx in range(NUM_GRAPHS):
    base = gidx * NODES_PER_GRAPH
    for i in range(NODES_PER_GRAPH):
      u = base + i
      v = base + (i + 1) % NODES_PER_GRAPH
      src += [u, v]
      dst += [v, u]
  edge_index = jnp.array([src, dst], dtype=jnp.int32)   # [2, E], E = 32
  batch = jnp.repeat(jnp.arange(NUM_GRAPHS, dtype=jnp.int32), NODES_PER_GRAPH)

  params = init_params(kp, NUM_FEATURES, HIDDEN, NUM_CLASSES, LAYERS)

  fwd = jax.jit(functools.partial(causal_gcn_begin_forward,
                                  num_graphs=NUM_GRAPHS))
  xc_logis, xo_logis, xco_logis = fwd(params, x, edge_index, batch)
  jax.block_until_ready((xc_logis, xo_logis, xco_logis))

  assert xc_logis.shape == (NUM_GRAPHS, NUM_CLASSES)
  assert xo_logis.shape == (NUM_GRAPHS, NUM_CLASSES)
  assert xco_logis.shape == (NUM_GRAPHS, NUM_CLASSES)
  assert bool(jnp.all(jnp.isfinite(xc_logis)))
  assert bool(jnp.all(jnp.isfinite(xo_logis)))
  assert bool(jnp.all(jnp.isfinite(xco_logis)))
  print("KERNEL_OK")
</pallas_src>

<mosaic_0001>
module attributes {stable_mosaic.version = 11 : i64} {
  func.func @fused_causal_gcn_kernel(%arg0: memref<16x8xf32, #tpu.memory_space<vmem>>, %arg1: memref<34x32xi32, #tpu.memory_space<vmem>>, %arg2: memref<8x160xf32, #tpu.memory_space<vmem>>, %arg3: memref<32x128xf32, #tpu.memory_space<vmem>>, %arg4: memref<96x108xf32, #tpu.memory_space<vmem>>, %arg5: memref<9x96xf32, #tpu.memory_space<vmem>>, %arg6: memref<2x128xf32, #tpu.memory_space<vmem>>) attributes {dimension_semantics = [], scalar_prefetch = 0 : i64, scratch_operands = 0 : i64, tpu.core_type = #tpu.core_type<tc>} {
    %c0 = arith.constant 0 : index
    %c0_0 = arith.constant 0 : index
    %0 = vector.load %arg0[%c0, %c0_0] : memref<16x8xf32, #tpu.memory_space<vmem>>, vector<16x8xf32>
    %c0_1 = arith.constant 0 : index
    %c0_2 = arith.constant 0 : index
    %1 = vector.load %arg1[%c0_1, %c0_2] : memref<34x32xi32, #tpu.memory_space<vmem>>, vector<32x1xi32>
    %c0_3 = arith.constant 0 : index
    %c1 = arith.constant 1 : index
    %2 = vector.load %arg1[%c0_3, %c1] : memref<34x32xi32, #tpu.memory_space<vmem>>, vector<32x1xi32>
    %c32 = arith.constant 32 : index
    %c0_4 = arith.constant 0 : index
    %3 = vector.load %arg1[%c32, %c0_4] : memref<34x32xi32, #tpu.memory_space<vmem>>, vector<1x32xi32>
    %c33 = arith.constant 33 : index
    %c0_5 = arith.constant 0 : index
    %4 = vector.load %arg1[%c33, %c0_5] : memref<34x32xi32, #tpu.memory_space<vmem>>, vector<1x16xi32>
    %c0_6 = arith.constant 0 : index
    %c0_7 = arith.constant 0 : index
    %5 = vector.load %arg2[%c0_6, %c0_7] : memref<8x160xf32, #tpu.memory_space<vmem>>, vector<8x96xf32>
    %cst = arith.constant dense<0.000000e+00> : vector<16x96xf32>
    %6 = tpu.matmul %0, %5, %cst {dimension_numbers = #tpu.dot_dimension_numbers<[1], [0], [0], [1], [0, 0, 1, 1], [], []>} : vector<16x8xf32>, vector<8x96xf32>, vector<16x96xf32> -> vector<16x96xf32>
    %c0_8 = arith.constant 0 : index
    %c0_9 = arith.constant 0 : index
    %7 = vector.load %arg5[%c0_8, %c0_9] : memref<9x96xf32, #tpu.memory_space<vmem>>, vector<1x96xf32>
    %8 = vector.broadcast %7 : vector<1x96xf32> to vector<16x96xf32>
    %9 = arith.addf %6, %8 : vector<16x96xf32>
    %10 = vector.extract_strided_slice %9 {offsets = [0, 0], sizes = [16, 32], strides = [1, 1]} : vector<16x96xf32> to vector<16x32xf32>
    %cst_10 = arith.constant 0.000000e+00 : f32
    %11 = vector.broadcast %cst_10 : f32 to vector<16x32xf32>
    %12 = arith.maximumf %10, %11 : vector<16x32xf32>
    %13 = tpu.iota {dimensions = array<i32: 1>} : vector<32x16xi32>
    %14 = vector.broadcast %1 : vector<32x1xi32> to vector<32x16xi32>
    %15 = arith.cmpi eq, %13, %14 : vector<32x16xi32>
    %16 = arith.extui %15 : vector<32x16xi1> to vector<32x16xi32>
    %17 = arith.sitofp %16 : vector<32x16xi32> to vector<32x16xf32>
    %18 = vector.broadcast %2 : vector<32x1xi32> to vector<32x16xi32>
    %19 = arith.cmpi eq, %13, %18 : vector<32x16xi32>
    %20 = arith.extui %19 : vector<32x16xi1> to vector<32x16xi32>
    %21 = arith.sitofp %20 : vector<32x16xi32> to vector<32x16xf32>
    %22 = tpu.iota {dimensions = array<i32: 0>} : vector<16x32xi32>
    %23 = vector.broadcast %3 : vector<1x32xi32> to vector<16x32xi32>
    %24 = arith.cmpi eq, %22, %23 : vector<16x32xi32>
    %25 = arith.extui %24 : vector<16x32xi1> to vector<16x32xi32>
    %26 = arith.sitofp %25 : vector<16x32xi32> to vector<16x32xf32>
    %27 = tpu.concatenate %17, %21 in 1 : vector<32x16xf32>, vector<32x16xf32> -> vector<32x32xf32>
    %28 = vector.extract_strided_slice %9 {offsets = [0, 32], sizes = [16, 32], strides = [1, 1]} : vector<16x96xf32> to vector<16x32xf32>
    %29 = vector.extract_strided_slice %9 {offsets = [0, 64], sizes = [16, 32], strides = [1, 1]} : vector<16x96xf32> to vector<16x32xf32>
    %30 = tpu.concatenate %28, %29 in 0 : vector<16x32xf32>, vector<16x32xf32> -> vector<32x32xf32>
    %cst_11 = arith.constant dense<0.000000e+00> : vector<32x32xf32>
    %31 = tpu.matmul %27, %30, %cst_11 {dimension_numbers = #tpu.dot_dimension_numbers<[1], [0], [0], [1], [0, 0, 1, 1], [], []>} : vector<32x32xf32>, vector<32x32xf32>, vector<32x32xf32> -> vector<32x32xf32>
    %cst_12 = arith.constant 0.000000e+00 : f32
    %32 = vector.broadcast %cst_12 : f32 to vector<32x32xf32>
    %33 = arith.maximumf %31, %32 : vector<32x32xf32>
    %c2 = arith.constant 2 : index
    %c0_13 = arith.constant 0 : index
    %34 = vector.load %arg5[%c2, %c0_13] : memref<9x96xf32, #tpu.memory_space<vmem>>, vector<1x32xf32>
    %35 = vector.broadcast %34 : vector<1x32xf32> to vector<16x32xf32>
    %36 = arith.mulf %12, %35 : vector<16x32xf32>
    %cst_14 = arith.constant dense<0.000000e+00> : vector<16xf32>
    %37 = vector.multi_reduction <add>, %36, %cst_14 [1] : vector<16x32xf32> to vector<16xf32>
    %38 = vector.shape_cast %37 : vector<16xf32> to vector<16x1xf32>
    %c1_15 = arith.constant 1 : index
    %c0_16 = arith.constant 0 : index
    %39 = vector.load %arg5[%c1_15, %c0_16] : memref<9x96xf32, #tpu.memory_space<vmem>>, vector<1x1xf32>
    %40 = vector.broadcast %39 : vector<1x1xf32> to vector<16x1xf32>
    %41 = arith.addf %38, %40 : vector<16x1xf32>
    %c3 = arith.constant 3 : index
    %c0_17 = arith.constant 0 : index
    %42 = vector.load %arg5[%c3, %c0_17] : memref<9x96xf32, #tpu.memory_space<vmem>>, vector<1x32xf32>
    %43 = vector.broadcast %42 : vector<1x32xf32> to vector<32x32xf32>
    %44 = arith.mulf %33, %43 : vector<32x32xf32>
    %cst_18 = arith.constant dense<0.000000e+00> : vector<32xf32>
    %45 = vector.multi_reduction <add>, %44, %cst_18 [1] : vector<32x32xf32> to vector<32xf32>
    %46 = vector.shape_cast %45 : vector<32xf32> to vector<32x1xf32>
    %c1_19 = arith.constant 1 : index
    %c1_20 = arith.constant 1 : index
    %47 = vector.load %arg5[%c1_19, %c1_20] : memref<9x96xf32, #tpu.memory_space<vmem>>, vector<1x1xf32>
    %48 = vector.broadcast %47 : vector<1x1xf32> to vector<32x1xf32>
    %49 = arith.addf %46, %48 : vector<32x1xf32>
    %cst_21 = arith.constant 0.000000e+00 : f32
    %50 = vector.broadcast %cst_21 : f32 to vector<16x1xf32>
    %51 = arith.subf %50, %41 : vector<16x1xf32>
    %52 = math.exp %51 : vector<16x1xf32>
    %cst_22 = arith.constant 1.000000e+00 : f32
    %53 = vector.broadcast %cst_22 : f32 to vector<16x1xf32>
    %54 = arith.addf %53, %52 : vector<16x1xf32>
    %cst_23 = arith.constant 1.000000e+00 : f32
    %55 = vector.broadcast %cst_23 : f32 to vector<16x1xf32>
    %56 = arith.divf %55, %54 : vector<16x1xf32>
    %cst_24 = arith.constant 1.000000e+00 : f32
    %57 = vector.broadcast %cst_24 : f32 to vector<16x1xf32>
    %58 = arith.subf %57, %56 : vector<16x1xf32>
    %cst_25 = arith.constant 0.000000e+00 : f32
    %59 = vector.broadcast %cst_25 : f32 to vector<32x1xf32>
    %60 = arith.subf %59, %49 : vector<32x1xf32>
    %61 = math.exp %60 : vector<32x1xf32>
    %cst_26 = arith.constant 1.000000e+00 : f32
    %62 = vector.broadcast %cst_26 : f32 to vector<32x1xf32>
    %63 = arith.addf %62, %61 : vector<32x1xf32>
    %cst_27 = arith.constant 1.000000e+00 : f32
    %64 = vector.broadcast %cst_27 : f32 to vector<32x1xf32>
    %65 = arith.divf %64, %63 : vector<32x1xf32>
    %cst_28 = arith.constant 1.000000e+00 : f32
    %66 = vector.broadcast %cst_28 : f32 to vector<32x1xf32>
    %67 = arith.subf %66, %65 : vector<32x1xf32>
    %68 = vector.broadcast %65 : vector<32x1xf32> to vector<32x16xf32>
    %69 = arith.mulf %17, %68 : vector<32x16xf32>
    %70 = vector.broadcast %67 : vector<32x1xf32> to vector<32x16xf32>
    %71 = arith.mulf %17, %70 : vector<32x16xf32>
    %72 = tpu.concatenate %69, %71 in 1 : vector<32x16xf32>, vector<32x16xf32> -> vector<32x32xf32>
    %cst_29 = arith.constant dense<0.000000e+00> : vector<16x32xf32>
    %73 = tpu.matmul %26, %72, %cst_29 {dimension_numbers = #tpu.dot_dimension_numbers<[1], [0], [0], [1], [0, 0, 1, 1], [], []>} : vector<16x32xf32>, vector<32x32xf32>, vector<16x32xf32> -> vector<16x32xf32>
    %cst_30 = arith.constant 0.000000e+00 : f32
    %74 = vector.broadcast %cst_30 : f32 to vector<16x16xf32>
    %75 = vector.extract_strided_slice %73 {offsets = [0, 0], sizes = [16, 16], strides = [1, 1]} : vector<16x32xf32> to vector<16x16xf32>
    %76 = tpu.concatenate %75, %74 in 1 : vector<16x16xf32>, vector<16x16xf32> -> vector<16x32xf32>
    %77 = vector.extract_strided_slice %73 {offsets = [0, 16], sizes = [16, 16], strides = [1, 1]} : vector<16x32xf32> to vector<16x16xf32>
    %78 = tpu.concatenate %74, %77 in 1 : vector<16x16xf32>, vector<16x16xf32> -> vector<16x32xf32>
    %79 = tpu.concatenate %76, %78 in 0 : vector<16x32xf32>, vector<16x32xf32> -> vector<32x32xf32>
    %80 = tpu.iota {dimensions = array<i32: 0>} : vector<32x32xi32>
    %81 = tpu.iota {dimensions = array<i32: 1>} : vector<32x32xi32>
    %82 = arith.cmpi eq, %80, %81 : vector<32x32xi32>
    %83 = arith.extui %82 : vector<32x32xi1> to vector<32x32xi32>
    %84 = arith.sitofp %83 : vector<32x32xi32> to vector<32x32xf32>
    %85 = arith.addf %79, %84 : vector<32x32xf32>
    %cst_31 = arith.constant dense<0.000000e+00> : vector<32xf32>
    %86 = vector.multi_reduction <add>, %85, %cst_31 [0] : vector<32x32xf32> to vector<32xf32>
    %87 = vector.shape_cast %86 : vector<32xf32> to vector<1x32xf32>
    %cst_32 = arith.constant 0.000000e+00 : f32
    %88 = vector.broadcast %cst_32 : f32 to vector<1x32xf32>
    %89 = arith.cmpf ogt, %87, %88 : vector<1x32xf32>
    %90 = math.rsqrt %87 : vector<1x32xf32>
    %cst_33 = arith.constant 0.000000e+00 : f32
    %91 = vector.broadcast %cst_33 : f32 to vector<1x32xf32>
    %92 = arith.select %89, %90, %91 : vector<1x32xi1>, vector<1x32xf32>
    %93 = vector.broadcast %92 : vector<1x32xf32> to vector<32x32xf32>
    %94 = arith.mulf %84, %93 : vector<32x32xf32>
    %cst_34 = arith.constant dense<0.000000e+00> : vector<32xf32>
    %95 = vector.multi_reduction <add>, %94, %cst_34 [1] : vector<32x32xf32> to vector<32xf32>
    %96 = vector.shape_cast %95 : vector<32xf32> to vector<32x1xf32>
    %97 = vector.broadcast %96 : vector<32x1xf32> to vector<32x32xf32>
    %98 = arith.mulf %97, %85 : vector<32x32xf32>
    %99 = vector.broadcast %92 : vector<1x32xf32> to vector<32x32xf32>
    %100 = arith.mulf %98, %99 : vector<32x32xf32>
    %101 = tpu.iota {dimensions = array<i32: 0>} : vector<32x32xi32>
    %c16_i32 = arith.constant 16 : i32
    %102 = vector.broadcast %c16_i32 : i32 to vector<32x32xi32>
    %103 = arith.cmpi slt, %101, %102 : vector<32x32xi32>
    %104 = vector.broadcast %56 : vector<16x1xf32> to vector<16x8xf32>
    %105 = arith.mulf %104, %0 : vector<16x8xf32>
    %106 = vector.broadcast %58 : vector<16x1xf32> to vector<16x8xf32>
    %107 = arith.mulf %106, %0 : vector<16x8xf32>
    %108 = tpu.concatenate %105, %107 in 0 : vector<16x8xf32>, vector<16x8xf32> -> vector<32x8xf32>
    %c0_35 = arith.constant 0 : index
    %c96 = arith.constant 96 : index
    %109 = vector.load %arg2[%c0_35, %c96] : memref<8x160xf32, #tpu.memory_space<vmem>>, vector<8x64xf32>
    %c4 = arith.constant 4 : index
    %c0_36 = arith.constant 0 : index
    %110 = vector.load %arg5[%c4, %c0_36] : memref<9x96xf32, #tpu.memory_space<vmem>>, vector<1x64xf32>
    %111 = vector.extract_strided_slice %108 {offsets = [0, 0], sizes = [16, 8], strides = [1, 1]} : vector<32x8xf32> to vector<16x8xf32>
    %cst_37 = arith.constant dense<0.000000e+00> : vector<8xf32>
    %112 = vector.multi_reduction <add>, %111, %cst_37 [0] : vector<16x8xf32> to vector<8xf32>
    %113 = vector.shape_cast %112 : vector<8xf32> to vector<1x8xf32>
    %cst_38 = arith.constant 1.600000e+01 : f32
    %114 = vector.broadcast %cst_38 : f32 to vector<1x8xf32>
    %115 = arith.divf %113, %114 : vector<1x8xf32>
    %116 = vector.broadcast %115 : vector<1x8xf32> to vector<16x8xf32>
    %117 = arith.subf %111, %116 : vector<16x8xf32>
    %118 = arith.mulf %117, %117 : vector<16x8xf32>
    %cst_39 = arith.constant dense<0.000000e+00> : vector<8xf32>
    %119 = vector.multi_reduction <add>, %118, %cst_39 [0] : vector<16x8xf32> to vector<8xf32>
    %120 = vector.shape_cast %119 : vector<8xf32> to vector<1x8xf32>
    %cst_40 = arith.constant 1.600000e+01 : f32
    %121 = vector.broadcast %cst_40 : f32 to vector<1x8xf32>
    %122 = arith.divf %120, %121 : vector<1x8xf32>
    %123 = vector.broadcast %115 : vector<1x8xf32> to vector<16x8xf32>
    %124 = arith.subf %111, %123 : vector<16x8xf32>
    %cst_41 = arith.constant 9.99999974E-6 : f32
    %125 = vector.broadcast %cst_41 : f32 to vector<1x8xf32>
    %126 = arith.addf %122, %125 : vector<1x8xf32>
    %127 = math.rsqrt %126 : vector<1x8xf32>
    %128 = vector.broadcast %127 : vector<1x8xf32> to vector<16x8xf32>
    %129 = arith.mulf %124, %128 : vector<16x8xf32>
    %cst_42 = arith.constant 9.99999974E-5 : f32
    %130 = vector.broadcast %cst_42 : f32 to vector<16x8xf32>
    %131 = arith.addf %129, %130 : vector<16x8xf32>
    %132 = vector.extract_strided_slice %108 {offsets = [16, 0], sizes = [16, 8], strides = [1, 1]} : vector<32x8xf32> to vector<16x8xf32>
    %cst_43 = arith.constant dense<0.000000e+00> : vector<8xf32>
    %133 = vector.multi_reduction <add>, %132, %cst_43 [0] : vector<16x8xf32> to vector<8xf32>
    %134 = vector.shape_cast %133 : vector<8xf32> to vector<1x8xf32>
    %cst_44 = arith.constant 1.600000e+01 : f32
    %135 = vector.broadcast %cst_44 : f32 to vector<1x8xf32>
    %136 = arith.divf %134, %135 : vector<1x8xf32>
    %137 = vector.broadcast %136 : vector<1x8xf32> to vector<16x8xf32>
    %138 = arith.subf %132, %137 : vector<16x8xf32>
    %139 = arith.mulf %138, %138 : vector<16x8xf32>
    %cst_45 = arith.constant dense<0.000000e+00> : vector<8xf32>
    %140 = vector.multi_reduction <add>, %139, %cst_45 [0] : vector<16x8xf32> to vector<8xf32>
    %141 = vector.shape_cast %140 : vector<8xf32> to vector<1x8xf32>
    %cst_46 = arith.constant 1.600000e+01 : f32
    %142 = vector.broadcast %cst_46 : f32 to vector<1x8xf32>
    %143 = arith.divf %141, %142 : vector<1x8xf32>
    %144 = vector.broadcast %136 : vector<1x8xf32> to vector<16x8xf32>
    %145 = arith.subf %132, %144 : vector<16x8xf32>
    %cst_47 = arith.constant 9.99999974E-6 : f32
    %146 = vector.broadcast %cst_47 : f32 to vector<1x8xf32>
    %147 = arith.addf %143, %146 : vector<1x8xf32>
    %148 = math.rsqrt %147 : vector<1x8xf32>
    %149 = vector.broadcast %148 : vector<1x8xf32> to vector<16x8xf32>
    %150 = arith.mulf %145, %149 : vector<16x8xf32>
    %cst_48 = arith.constant 9.99999974E-5 : f32
    %151 = vector.broadcast %cst_48 : f32 to vector<16x8xf32>
    %152 = arith.addf %150, %151 : vector<16x8xf32>
    %153 = tpu.concatenate %131, %152 in 0 : vector<16x8xf32>, vector<16x8xf32> -> vector<32x8xf32>
    %cst_49 = arith.constant dense<0.000000e+00> : vector<32x64xf32>
    %154 = tpu.matmul %153, %109, %cst_49 {dimension_numbers = #tpu.dot_dimension_numbers<[1], [0], [0], [1], [0, 0, 1, 1], [], []>} : vector<32x8xf32>, vector<8x64xf32>, vector<32x64xf32> -> vector<32x64xf32>
    %155 = vector.extract_strided_slice %154 {offsets = [0, 0], sizes = [32, 32], strides = [1, 1]} : vector<32x64xf32> to vector<32x32xf32>
    %156 = vector.extract_strided_slice %154 {offsets = [0, 32], sizes = [32, 32], strides = [1, 1]} : vector<32x64xf32> to vector<32x32xf32>
    %157 = arith.select %103, %155, %156 : vector<32x32xi1>, vector<32x32xf32>
    %158 = vector.extract_strided_slice %110 {offsets = [0, 0], sizes = [1, 32], strides = [1, 1]} : vector<1x64xf32> to vector<1x32xf32>
    %159 = vector.extract_strided_slice %110 {offsets = [0, 32], sizes = [1, 32], strides = [1, 1]} : vector<1x64xf32> to vector<1x32xf32>
    %160 = vector.shape_cast %158 : vector<1x32xf32> to vector<1x32xf32>
    %161 = vector.broadcast %160 : vector<1x32xf32> to vector<32x32xf32>
    %162 = vector.shape_cast %159 : vector<1x32xf32> to vector<1x32xf32>
    %163 = vector.broadcast %162 : vector<1x32xf32> to vector<32x32xf32>
    %164 = arith.select %103, %161, %163 : vector<32x32xi1>, vector<32x32xf32>
    %cst_50 = arith.constant dense<0.000000e+00> : vector<32x32xf32>
    %165 = tpu.matmul %100, %157, %cst_50 {dimension_numbers = #tpu.dot_dimension_numbers<[1], [0], [0], [1], [0, 0, 1, 1], [], []>} : vector<32x32xf32>, vector<32x32xf32>, vector<32x32xf32> -> vector<32x32xf32>
    %166 = arith.addf %165, %164 : vector<32x32xf32>
    %cst_51 = arith.constant 0.000000e+00 : f32
    %167 = vector.broadcast %cst_51 : f32 to vector<32x32xf32>
    %168 = arith.maximumf %166, %167 : vector<32x32xf32>
    %c0_52 = arith.constant 0 : index
    %c0_53 = arith.constant 0 : index
    %169 = vector.load %arg3[%c0_52, %c0_53] : memref<32x128xf32, #tpu.memory_space<vmem>>, vector<32x64xf32>
    %c5 = arith.constant 5 : index
    %c0_54 = arith.constant 0 : index
    %170 = vector.load %arg5[%c5, %c0_54] : memref<9x96xf32, #tpu.memory_space<vmem>>, vector<1x64xf32>
    %171 = vector.extract_strided_slice %168 {offsets = [0, 0], sizes = [16, 32], strides = [1, 1]} : vector<32x32xf32> to vector<16x32xf32>
    %cst_55 = arith.constant dense<0.000000e+00> : vector<32xf32>
    %172 = vector.multi_reduction <add>, %171, %cst_55 [0] : vector<16x32xf32> to vector<32xf32>
    %173 = vector.shape_cast %172 : vector<32xf32> to vector<1x32xf32>
    %cst_56 = arith.constant 1.600000e+01 : f32
    %174 = vector.broadcast %cst_56 : f32 to vector<1x32xf32>
    %175 = arith.divf %173, %174 : vector<1x32xf32>
    %176 = vector.broadcast %175 : vector<1x32xf32> to vector<16x32xf32>
    %177 = arith.subf %171, %176 : vector<16x32xf32>
    %178 = arith.mulf %177, %177 : vector<16x32xf32>
    %cst_57 = arith.constant dense<0.000000e+00> : vector<32xf32>
    %179 = vector.multi_reduction <add>, %178, %cst_57 [0] : vector<16x32xf32> to vector<32xf32>
    %180 = vector.shape_cast %179 : vector<32xf32> to vector<1x32xf32>
    %cst_58 = arith.constant 1.600000e+01 : f32
    %181 = vector.broadcast %cst_58 : f32 to vector<1x32xf32>
    %182 = arith.divf %180, %181 : vector<1x32xf32>
    %183 = vector.broadcast %175 : vector<1x32xf32> to vector<16x32xf32>
    %184 = arith.subf %171, %183 : vector<16x32xf32>
    %cst_59 = arith.constant 9.99999974E-6 : f32
    %185 = vector.broadcast %cst_59 : f32 to vector<1x32xf32>
    %186 = arith.addf %182, %185 : vector<1x32xf32>
    %187 = math.rsqrt %186 : vector<1x32xf32>
    %188 = vector.broadcast %187 : vector<1x32xf32> to vector<16x32xf32>
    %189 = arith.mulf %184, %188 : vector<16x32xf32>
    %cst_60 = arith.constant 9.99999974E-5 : f32
    %190 = vector.broadcast %cst_60 : f32 to vector<16x32xf32>
    %191 = arith.addf %189, %190 : vector<16x32xf32>
    %192 = vector.extract_strided_slice %168 {offsets = [16, 0], sizes = [16, 32], strides = [1, 1]} : vector<32x32xf32> to vector<16x32xf32>
    %cst_61 = arith.constant dense<0.000000e+00> : vector<32xf32>
    %193 = vector.multi_reduction <add>, %192, %cst_61 [0] : vector<16x32xf32> to vector<32xf32>
    %194 = vector.shape_cast %193 : vector<32xf32> to vector<1x32xf32>
    %cst_62 = arith.constant 1.600000e+01 : f32
    %195 = vector.broadcast %cst_62 : f32 to vector<1x32xf32>
    %196 = arith.divf %194, %195 : vector<1x32xf32>
    %197 = vector.broadcast %196 : vector<1x32xf32> to vector<16x32xf32>
    %198 = arith.subf %192, %197 : vector<16x32xf32>
    %199 = arith.mulf %198, %198 : vector<16x32xf32>
    %cst_63 = arith.constant dense<0.000000e+00> : vector<32xf32>
    %200 = vector.multi_reduction <add>, %199, %cst_63 [0] : vector<16x32xf32> to vector<32xf32>
    %201 = vector.shape_cast %200 : vector<32xf32> to vector<1x32xf32>
    %cst_64 = arith.constant 1.600000e+01 : f32
    %202 = vector.broadcast %cst_64 : f32 to vector<1x32xf32>
    %203 = arith.divf %201, %202 : vector<1x32xf32>
    %204 = vector.broadcast %196 : vector<1x32xf32> to vector<16x32xf32>
    %205 = arith.subf %192, %204 : vector<16x32xf32>
    %cst_65 = arith.constant 9.99999974E-6 : f32
    %206 = vector.broadcast %cst_65 : f32 to vector<1x32xf32>
    %207 = arith.addf %203, %206 : vector<1x32xf32>
    %208 = math.rsqrt %207 : vector<1x32xf32>
    %209 = vector.broadcast %208 : vector<1x32xf32> to vector<16x32xf32>
    %210 = arith.mulf %205, %209 : vector<16x32xf32>
    %cst_66 = arith.constant 9.99999974E-5 : f32
    %211 = vector.broadcast %cst_66 : f32 to vector<16x32xf32>
    %212 = arith.addf %210, %211 : vector<16x32xf32>
    %213 = tpu.concatenate %191, %212 in 0 : vector<16x32xf32>, vector<16x32xf32> -> vector<32x32xf32>
    %cst_67 = arith.constant dense<0.000000e+00> : vector<32x64xf32>
    %214 = tpu.matmul %213, %169, %cst_67 {dimension_numbers = #tpu.dot_dimension_numbers<[1], [0], [0], [1], [0, 0, 1, 1], [], []>} : vector<32x32xf32>, vector<32x64xf32>, vector<32x64xf32> -> vector<32x64xf32>
    %215 = vector.extract_strided_slice %214 {offsets = [0, 0], sizes = [32, 32], strides = [1, 1]} : vector<32x64xf32> to vector<32x32xf32>
    %216 = vector.extract_strided_slice %214 {offsets = [0, 32], sizes = [32, 32], strides = [1, 1]} : vector<32x64xf32> to vector<32x32xf32>
    %217 = arith.select %103, %215, %216 : vector<32x32xi1>, vector<32x32xf32>
    %218 = vector.extract_strided_slice %170 {offsets = [0, 0], sizes = [1, 32], strides = [1, 1]} : vector<1x64xf32> to vector<1x32xf32>
    %219 = vector.extract_strided_slice %170 {offsets = [0, 32], sizes = [1, 32], strides = [1, 1]} : vector<1x64xf32> to vector<1x32xf32>
    %220 = vector.shape_cast %218 : vector<1x32xf32> to vector<1x32xf32>
    %221 = vector.broadcast %220 : vector<1x32xf32> to vector<32x32xf32>
    %222 = vector.shape_cast %219 : vector<1x32xf32> to vector<1x32xf32>
    %223 = vector.broadcast %222 : vector<1x32xf32> to vector<32x32xf32>
    %224 = arith.select %103, %221, %223 : vector<32x32xi1>, vector<32x32xf32>
    %cst_68 = arith.constant dense<0.000000e+00> : vector<32x32xf32>
    %225 = tpu.matmul %100, %217, %cst_68 {dimension_numbers = #tpu.dot_dimension_numbers<[1], [0], [0], [1], [0, 0, 1, 1], [], []>} : vector<32x32xf32>, vector<32x32xf32>, vector<32x32xf32> -> vector<32x32xf32>
    %226 = arith.addf %225, %224 : vector<32x32xf32>
    %cst_69 = arith.constant 0.000000e+00 : f32
    %227 = vector.broadcast %cst_69 : f32 to vector<32x32xf32>
    %228 = arith.maximumf %226, %227 : vector<32x32xf32>
    %c0_70 = arith.constant 0 : index
    %c64 = arith.constant 64 : index
    %229 = vector.load %arg3[%c0_70, %c64] : memref<32x128xf32, #tpu.memory_space<vmem>>, vector<32x64xf32>
    %c6 = arith.constant 6 : index
    %c0_71 = arith.constant 0 : index
    %230 = vector.load %arg5[%c6, %c0_71] : memref<9x96xf32, #tpu.memory_space<vmem>>, vector<1x64xf32>
    %231 = vector.extract_strided_slice %228 {offsets = [0, 0], sizes = [16, 32], strides = [1, 1]} : vector<32x32xf32> to vector<16x32xf32>
    %cst_72 = arith.constant dense<0.000000e+00> : vector<32xf32>
    %232 = vector.multi_reduction <add>, %231, %cst_72 [0] : vector<16x32xf32> to vector<32xf32>
    %233 = vector.shape_cast %232 : vector<32xf32> to vector<1x32xf32>
    %cst_73 = arith.constant 1.600000e+01 : f32
    %234 = vector.broadcast %cst_73 : f32 to vector<1x32xf32>
    %235 = arith.divf %233, %234 : vector<1x32xf32>
    %236 = vector.broadcast %235 : vector<1x32xf32> to vector<16x32xf32>
    %237 = arith.subf %231, %236 : vector<16x32xf32>
    %238 = arith.mulf %237, %237 : vector<16x32xf32>
    %cst_74 = arith.constant dense<0.000000e+00> : vector<32xf32>
    %239 = vector.multi_reduction <add>, %238, %cst_74 [0] : vector<16x32xf32> to vector<32xf32>
    %240 = vector.shape_cast %239 : vector<32xf32> to vector<1x32xf32>
    %cst_75 = arith.constant 1.600000e+01 : f32
    %241 = vector.broadcast %cst_75 : f32 to vector<1x32xf32>
    %242 = arith.divf %240, %241 : vector<1x32xf32>
    %243 = vector.broadcast %235 : vector<1x32xf32> to vector<16x32xf32>
    %244 = arith.subf %231, %243 : vector<16x32xf32>
    %cst_76 = arith.constant 9.99999974E-6 : f32
    %245 = vector.broadcast %cst_76 : f32 to vector<1x32xf32>
    %246 = arith.addf %242, %245 : vector<1x32xf32>
    %247 = math.rsqrt %246 : vector<1x32xf32>
    %248 = vector.broadcast %247 : vector<1x32xf32> to vector<16x32xf32>
    %249 = arith.mulf %244, %248 : vector<16x32xf32>
    %cst_77 = arith.constant 9.99999974E-5 : f32
    %250 = vector.broadcast %cst_77 : f32 to vector<16x32xf32>
    %251 = arith.addf %249, %250 : vector<16x32xf32>
    %252 = vector.extract_strided_slice %228 {offsets = [16, 0], sizes = [16, 32], strides = [1, 1]} : vector<32x32xf32> to vector<16x32xf32>
    %cst_78 = arith.constant dense<0.000000e+00> : vector<32xf32>
    %253 = vector.multi_reduction <add>, %252, %cst_78 [0] : vector<16x32xf32> to vector<32xf32>
    %254 = vector.shape_cast %253 : vector<32xf32> to vector<1x32xf32>
    %cst_79 = arith.constant 1.600000e+01 : f32
    %255 = vector.broadcast %cst_79 : f32 to vector<1x32xf32>
    %256 = arith.divf %254, %255 : vector<1x32xf32>
    %257 = vector.broadcast %256 : vector<1x32xf32> to vector<16x32xf32>
    %258 = arith.subf %252, %257 : vector<16x32xf32>
    %259 = arith.mulf %258, %258 : vector<16x32xf32>
    %cst_80 = arith.constant dense<0.000000e+00> : vector<32xf32>
    %260 = vector.multi_reduction <add>, %259, %cst_80 [0] : vector<16x32xf32> to vector<32xf32>
    %261 = vector.shape_cast %260 : vector<32xf32> to vector<1x32xf32>
    %cst_81 = arith.constant 1.600000e+01 : f32
    %262 = vector.broadcast %cst_81 : f32 to vector<1x32xf32>
    %263 = arith.divf %261, %262 : vector<1x32xf32>
    %264 = vector.broadcast %256 : vector<1x32xf32> to vector<16x32xf32>
    %265 = arith.subf %252, %264 : vector<16x32xf32>
    %cst_82 = arith.constant 9.99999974E-6 : f32
    %266 = vector.broadcast %cst_82 : f32 to vector<1x32xf32>
    %267 = arith.addf %263, %266 : vector<1x32xf32>
    %268 = math.rsqrt %267 : vector<1x32xf32>
    %269 = vector.broadcast %268 : vector<1x32xf32> to vector<16x32xf32>
    %270 = arith.mulf %265, %269 : vector<16x32xf32>
    %cst_83 = arith.constant 9.99999974E-5 : f32
    %271 = vector.broadcast %cst_83 : f32 to vector<16x32xf32>
    %272 = arith.addf %270, %271 : vector<16x32xf32>
    %273 = tpu.concatenate %251, %272 in 0 : vector<16x32xf32>, vector<16x32xf32> -> vector<32x32xf32>
    %cst_84 = arith.constant dense<0.000000e+00> : vector<32x64xf32>
    %274 = tpu.matmul %273, %229, %cst_84 {dimension_numbers = #tpu.dot_dimension_numbers<[1], [0], [0], [1], [0, 0, 1, 1], [], []>} : vector<32x32xf32>, vector<32x64xf32>, vector<32x64xf32> -> vector<32x64xf32>
    %275 = vector.extract_strided_slice %274 {offsets = [0, 0], sizes = [32, 32], strides = [1, 1]} : vector<32x64xf32> to vector<32x32xf32>
    %276 = vector.extract_strided_slice %274 {offsets = [0, 32], sizes = [32, 32], strides = [1, 1]} : vector<32x64xf32> to vector<32x32xf32>
    %277 = arith.select %103, %275, %276 : vector<32x32xi1>, vector<32x32xf32>
    %278 = vector.extract_strided_slice %230 {offsets = [0, 0], sizes = [1, 32], strides = [1, 1]} : vector<1x64xf32> to vector<1x32xf32>
    %279 = vector.extract_strided_slice %230 {offsets = [0, 32], sizes = [1, 32], strides = [1, 1]} : vector<1x64xf32> to vector<1x32xf32>
    %280 = vector.shape_cast %278 : vector<1x32xf32> to vector<1x32xf32>
    %281 = vector.broadcast %280 : vector<1x32xf32> to vector<32x32xf32>
    %282 = vector.shape_cast %279 : vector<1x32xf32> to vector<1x32xf32>
    %283 = vector.broadcast %282 : vector<1x32xf32> to vector<32x32xf32>
    %284 = arith.select %103, %281, %283 : vector<32x32xi1>, vector<32x32xf32>
    %cst_85 = arith.constant dense<0.000000e+00> : vector<32x32xf32>
    %285 = tpu.matmul %100, %277, %cst_85 {dimension_numbers = #tpu.dot_dimension_numbers<[1], [0], [0], [1], [0, 0, 1, 1], [], []>} : vector<32x32xf32>, vector<32x32xf32>, vector<32x32xf32> -> vector<32x32xf32>
    %286 = arith.addf %285, %284 : vector<32x32xf32>
    %cst_86 = arith.constant 0.000000e+00 : f32
    %287 = vector.broadcast %cst_86 : f32 to vector<32x32xf32>
    %288 = arith.maximumf %286, %287 : vector<32x32xf32>
    %289 = tpu.iota {dimensions = array<i32: 0>} : vector<2x16xi32>
    %290 = vector.broadcast %4 : vector<1x16xi32> to vector<2x16xi32>
    %291 = arith.cmpi eq, %289, %290 : vector<2x16xi32>
    %292 = arith.extui %291 : vector<2x16xi1> to vector<2x16xi32>
    %293 = arith.sitofp %292 : vector<2x16xi32> to vector<2x16xf32>
    %294 = vector.extract_strided_slice %288 {offsets = [0, 0], sizes = [16, 32], strides = [1, 1]} : vector<32x32xf32> to vector<16x32xf32>
    %cst_87 = arith.constant dense<0.000000e+00> : vector<2x32xf32>
    %295 = tpu.matmul %293, %294, %cst_87 {dimension_numbers = #tpu.dot_dimension_numbers<[1], [0], [0], [1], [0, 0, 1, 1], [], []>} : vector<2x16xf32>, vector<16x32xf32>, vector<2x32xf32> -> vector<2x32xf32>
    %296 = vector.extract_strided_slice %288 {offsets = [16, 0], sizes = [16, 32], strides = [1, 1]} : vector<32x32xf32> to vector<16x32xf32>
    %cst_88 = arith.constant dense<0.000000e+00> : vector<2x32xf32>
    %297 = tpu.matmul %293, %296, %cst_88 {dimension_numbers = #tpu.dot_dimension_numbers<[1], [0], [0], [1], [0, 0, 1, 1], [], []>} : vector<2x16xf32>, vector<16x32xf32>, vector<2x32xf32> -> vector<2x32xf32>
    %298 = arith.addf %295, %297 : vector<2x32xf32>
    %299 = tpu.concatenate %295, %297, %298 in 1 : vector<2x32xf32>, vector<2x32xf32>, vector<2x32xf32> -> vector<2x96xf32>
    %cst_89 = arith.constant dense<0.000000e+00> : vector<96xf32>
    %300 = vector.multi_reduction <add>, %299, %cst_89 [0] : vector<2x96xf32> to vector<96xf32>
    %301 = vector.shape_cast %300 : vector<96xf32> to vector<1x96xf32>
    %cst_90 = arith.constant 2.000000e+00 : f32
    %302 = vector.broadcast %cst_90 : f32 to vector<1x96xf32>
    %303 = arith.divf %301, %302 : vector<1x96xf32>
    %304 = vector.broadcast %303 : vector<1x96xf32> to vector<2x96xf32>
    %305 = arith.subf %299, %304 : vector<2x96xf32>
    %306 = arith.mulf %305, %305 : vector<2x96xf32>
    %cst_91 = arith.constant dense<0.000000e+00> : vector<96xf32>
    %307 = vector.multi_reduction <add>, %306, %cst_91 [0] : vector<2x96xf32> to vector<96xf32>
    %308 = vector.shape_cast %307 : vector<96xf32> to vector<1x96xf32>
    %cst_92 = arith.constant 2.000000e+00 : f32
    %309 = vector.broadcast %cst_92 : f32 to vector<1x96xf32>
    %310 = arith.divf %308, %309 : vector<1x96xf32>
    %311 = vector.broadcast %303 : vector<1x96xf32> to vector<2x96xf32>
    %312 = arith.subf %299, %311 : vector<2x96xf32>
    %cst_93 = arith.constant 9.99999974E-6 : f32
    %313 = vector.broadcast %cst_93 : f32 to vector<1x96xf32>
    %314 = arith.addf %310, %313 : vector<1x96xf32>
    %315 = math.rsqrt %314 : vector<1x96xf32>
    %316 = vector.broadcast %315 : vector<1x96xf32> to vector<2x96xf32>
    %317 = arith.mulf %312, %316 : vector<2x96xf32>
    %cst_94 = arith.constant 9.99999974E-5 : f32
    %318 = vector.broadcast %cst_94 : f32 to vector<2x96xf32>
    %319 = arith.addf %317, %318 : vector<2x96xf32>
    %c0_95 = arith.constant 0 : index
    %c0_96 = arith.constant 0 : index
    %320 = vector.load %arg4[%c0_95, %c0_96] : memref<96x108xf32, #tpu.memory_space<vmem>>, vector<96x96xf32>
    %cst_97 = arith.constant dense<0.000000e+00> : vector<2x96xf32>
    %321 = tpu.matmul %319, %320, %cst_97 {dimension_numbers = #tpu.dot_dimension_numbers<[1], [0], [0], [1], [0, 0, 1, 1], [], []>} : vector<2x96xf32>, vector<96x96xf32>, vector<2x96xf32> -> vector<2x96xf32>
    %c7 = arith.constant 7 : index
    %c0_98 = arith.constant 0 : index
    %322 = vector.load %arg5[%c7, %c0_98] : memref<9x96xf32, #tpu.memory_space<vmem>>, vector<1x96xf32>
    %323 = vector.broadcast %322 : vector<1x96xf32> to vector<2x96xf32>
    %324 = arith.addf %321, %323 : vector<2x96xf32>
    %cst_99 = arith.constant 0.000000e+00 : f32
    %325 = vector.broadcast %cst_99 : f32 to vector<2x96xf32>
    %326 = arith.maximumf %324, %325 : vector<2x96xf32>
    %cst_100 = arith.constant dense<0.000000e+00> : vector<96xf32>
    %327 = vector.multi_reduction <add>, %326, %cst_100 [0] : vector<2x96xf32> to vector<96xf32>
    %328 = vector.shape_cast %327 : vector<96xf32> to vector<1x96xf32>
    %cst_101 = arith.constant 2.000000e+00 : f32
    %329 = vector.broadcast %cst_101 : f32 to vector<1x96xf32>
    %330 = arith.divf %328, %329 : vector<1x96xf32>
    %331 = vector.broadcast %330 : vector<1x96xf32> to vector<2x96xf32>
    %332 = arith.subf %326, %331 : vector<2x96xf32>
    %333 = arith.mulf %332, %332 : vector<2x96xf32>
    %cst_102 = arith.constant dense<0.000000e+00> : vector<96xf32>
    %334 = vector.multi_reduction <add>, %333, %cst_102 [0] : vector<2x96xf32> to vector<96xf32>
    %335 = vector.shape_cast %334 : vector<96xf32> to vector<1x96xf32>
    %cst_103 = arith.constant 2.000000e+00 : f32
    %336 = vector.broadcast %cst_103 : f32 to vector<1x96xf32>
    %337 = arith.divf %335, %336 : vector<1x96xf32>
    %338 = vector.broadcast %330 : vector<1x96xf32> to vector<2x96xf32>
    %339 = arith.subf %326, %338 : vector<2x96xf32>
    %cst_104 = arith.constant 9.99999974E-6 : f32
    %340 = vector.broadcast %cst_104 : f32 to vector<1x96xf32>
    %341 = arith.addf %337, %340 : vector<1x96xf32>
    %342 = math.rsqrt %341 : vector<1x96xf32>
    %343 = vector.broadcast %342 : vector<1x96xf32> to vector<2x96xf32>
    %344 = arith.mulf %339, %343 : vector<2x96xf32>
    %cst_105 = arith.constant 9.99999974E-5 : f32
    %345 = vector.broadcast %cst_105 : f32 to vector<2x96xf32>
    %346 = arith.addf %344, %345 : vector<2x96xf32>
    %c0_106 = arith.constant 0 : index
    %c96_107 = arith.constant 96 : index
    %347 = vector.load %arg4[%c0_106, %c96_107] : memref<96x108xf32, #tpu.memory_space<vmem>>, vector<96x12xf32>
    %cst_108 = arith.constant dense<0.000000e+00> : vector<2x12xf32>
    %348 = tpu.matmul %346, %347, %cst_108 {dimension_numbers = #tpu.dot_dimension_numbers<[1], [0], [0], [1], [0, 0, 1, 1], [], []>} : vector<2x96xf32>, vector<96x12xf32>, vector<2x12xf32> -> vector<2x12xf32>
    %c8 = arith.constant 8 : index
    %c0_109 = arith.constant 0 : index
    %349 = vector.load %arg5[%c8, %c0_109] : memref<9x96xf32, #tpu.memory_space<vmem>>, vector<1x12xf32>
    %350 = vector.broadcast %349 : vector<1x12xf32> to vector<2x12xf32>
    %351 = arith.addf %348, %350 : vector<2x12xf32>
    %352 = vector.extract_strided_slice %351 {offsets = [0, 0], sizes = [2, 4], strides = [1, 1]} : vector<2x12xf32> to vector<2x4xf32>
    %cst_110 = arith.constant dense<0xFF800000> : vector<2xf32>
    %353 = vector.multi_reduction <maximumf>, %352, %cst_110 [1] : vector<2x4xf32> to vector<2xf32>
    %354 = vector.shape_cast %353 : vector<2xf32> to vector<2x1xf32>
    %355 = vector.broadcast %354 : vector<2x1xf32> to vector<2x4xf32>
    %356 = arith.subf %352, %355 : vector<2x4xf32>
    %357 = math.exp %356 : vector<2x4xf32>
    %cst_111 = arith.constant dense<0.000000e+00> : vector<2xf32>
    %358 = vector.multi_reduction <add>, %357, %cst_111 [1] : vector<2x4xf32> to vector<2xf32>
    %359 = vector.shape_cast %358 : vector<2xf32> to vector<2x1xf32>
    %360 = math.log %359 : vector<2x1xf32>
    %361 = vector.broadcast %360 : vector<2x1xf32> to vector<2x4xf32>
    %362 = arith.subf %356, %361 : vector<2x4xf32>
    %363 = vector.extract_strided_slice %351 {offsets = [0, 4], sizes = [2, 4], strides = [1, 1]} : vector<2x12xf32> to vector<2x4xf32>
    %cst_112 = arith.constant dense<0xFF800000> : vector<2xf32>
    %364 = vector.multi_reduction <maximumf>, %363, %cst_112 [1] : vector<2x4xf32> to vector<2xf32>
    %365 = vector.shape_cast %364 : vector<2xf32> to vector<2x1xf32>
    %366 = vector.broadcast %365 : vector<2x1xf32> to vector<2x4xf32>
    %367 = arith.subf %363, %366 : vector<2x4xf32>
    %368 = math.exp %367 : vector<2x4xf32>
    %cst_113 = arith.constant dense<0.000000e+00> : vector<2xf32>
    %369 = vector.multi_reduction <add>, %368, %cst_113 [1] : vector<2x4xf32> to vector<2xf32>
    %370 = vector.shape_cast %369 : vector<2xf32> to vector<2x1xf32>
    %371 = math.log %370 : vector<2x1xf32>
    %372 = vector.broadcast %371 : vector<2x1xf32> to vector<2x4xf32>
    %373 = arith.subf %367, %372 : vector<2x4xf32>
    %374 = vector.extract_strided_slice %351 {offsets = [0, 8], sizes = [2, 4], strides = [1, 1]} : vector<2x12xf32> to vector<2x4xf32>
    %cst_114 = arith.constant dense<0xFF800000> : vector<2xf32>
    %375 = vector.multi_reduction <maximumf>, %374, %cst_114 [1] : vector<2x4xf32> to vector<2xf32>
    %376 = vector.shape_cast %375 : vector<2xf32> to vector<2x1xf32>
    %377 = vector.broadcast %376 : vector<2x1xf32> to vector<2x4xf32>
    %378 = arith.subf %374, %377 : vector<2x4xf32>
    %379 = math.exp %378 : vector<2x4xf32>
    %cst_115 = arith.constant dense<0.000000e+00> : vector<2xf32>
    %380 = vector.multi_reduction <add>, %379, %cst_115 [1] : vector<2x4xf32> to vector<2xf32>
    %381 = vector.shape_cast %380 : vector<2xf32> to vector<2x1xf32>
    %382 = math.log %381 : vector<2x1xf32>
    %383 = vector.broadcast %382 : vector<2x1xf32> to vector<2x4xf32>
    %384 = arith.subf %378, %383 : vector<2x4xf32>
    %385 = tpu.concatenate %362, %373, %384 in 1 : vector<2x4xf32>, vector<2x4xf32>, vector<2x4xf32> -> vector<2x12xf32>
    %cst_116 = arith.constant 0.000000e+00 : f32
    %386 = vector.broadcast %cst_116 : f32 to vector<2x116xf32>
    %387 = tpu.concatenate %385, %386 in 1 : vector<2x12xf32>, vector<2x116xf32> -> vector<2x128xf32>
    %c0_117 = arith.constant 0 : index
    %c0_118 = arith.constant 0 : index
    %388 = vector.load %arg6[%c0_117, %c0_118] : memref<2x128xf32, #tpu.memory_space<vmem>>, vector<2x128xf32>
    tpu.vector_store %arg6[%c0_117, %c0_118], %387 {strides = array<i32>} : memref<2x128xf32, #tpu.memory_space<vmem>>, vector<2x128xf32>,
    return
  }
}

</mosaic_0001>

<llo_original>
// kernel: causal_gcn_begin_forward.1
$region0: #{causal_gcn_begin_forward.1}
  #allocation0 [shape = 'u32[]', space=smem, size = 0x4, offset = 0x4, fixed_abs, tag = 'smem constant byte address 0x4 - core index']
  #allocation1 [shape = 'u32[144,128]{1,0:T(1,128)}', space=vmem, size = 0x12000, scoped, tag = 'internal scratch']
  %s0 = inlined_call_operand.vmem [shape: f32[16,8], index: 0, kind: input, shape index: {}]
  %s1 = inlined_call_operand.vmem [shape: s32[34,32], index: 1, kind: input, shape index: {}]
  %s2 = inlined_call_operand.vmem [shape: f32[8,160], index: 2, kind: input, shape index: {}]
  %s3 = inlined_call_operand.vmem [shape: f32[32,128], index: 3, kind: input, shape index: {}]
  %s4 = inlined_call_operand.vmem [shape: f32[96,108], index: 4, kind: input, shape index: {}]
  %s5 = inlined_call_operand.vmem [shape: f32[9,96], index: 5, kind: input, shape index: {}]
  %s6 = inlined_call_operand.vmem [shape: f32[2,128], index: 6, kind: output, shape index: {}]
  %s7 = sld [smem:[#allocation0]]
  $region34: #{causal_gcn_begin_forward.1} parent=0
    _
  %s9 = ssub.s32 1, %s7
  %s10 = scalar_select 0, %s9, %s7
  // Predicated region
  $region2: #{causal_gcn_begin_forward.1} parent=0 // pred_check
    _
  $region3: #{causal_gcn_begin_forward.1} parent=0 // pred_check_branch
    %12 = sbr.rel (0) target = $region5
  $region4: #{causal_gcn_begin_forward.1} parent=0 // pred_region
    _
  $region5: #{causal_gcn_begin_forward.1} parent=0 // pred_fallthru
    _
  // Predicated region
  $region6: #{causal_gcn_begin_forward.1} parent=0 // pred_check
    _
  $region7: #{causal_gcn_begin_forward.1} parent=0 // pred_check_branch
    %14 = sbr.rel (0) target = $region9
  $region8: #{causal_gcn_begin_forward.1} parent=0 // pred_region
    _
  $region9: #{causal_gcn_begin_forward.1} parent=0 // pred_fallthru
    _
  // Predicated region
  $region10: #{causal_gcn_begin_forward.1} parent=0 // pred_check
    _
  $region11: #{causal_gcn_begin_forward.1} parent=0 // pred_check_branch
    %16 = sbr.rel (0) target = $region13
  $region12: #{causal_gcn_begin_forward.1} parent=0 // pred_region
    _
  $region13: #{causal_gcn_begin_forward.1} parent=0 // pred_fallthru
    _
  // Predicated region
  $region14: #{causal_gcn_begin_forward.1} parent=0 // pred_check
    _
  $region15: #{causal_gcn_begin_forward.1} parent=0 // pred_check_branch
    %18 = sbr.rel (0) target = $region17
  $region16: #{causal_gcn_begin_forward.1} parent=0 // pred_region
    _
  $region17: #{causal_gcn_begin_forward.1} parent=0 // pred_fallthru
    _
  // Predicated region
  $region18: #{causal_gcn_begin_forward.1} parent=0 // pred_check
    _
  $region19: #{causal_gcn_begin_forward.1} parent=0 // pred_check_branch
    %20 = sbr.rel (0) target = $region21
  $region20: #{causal_gcn_begin_forward.1} parent=0 // pred_region
    _
  $region21: #{causal_gcn_begin_forward.1} parent=0 // pred_fallthru
    _
  // Predicated region
  $region22: #{causal_gcn_begin_forward.1} parent=0 // pred_check
    _
  $region23: #{causal_gcn_begin_forward.1} parent=0 // pred_check_branch
    %22 = sbr.rel (0) target = $region25
  $region24: #{causal_gcn_begin_forward.1} parent=0 // pred_region
    _
  $region25: #{causal_gcn_begin_forward.1} parent=0 // pred_fallthru
    _
  %v23 = vld [vmem:[%s0] sm:$0xff]
  %v24 = vld [vmem:[%s0 + $0x8] sm:$0xff]
  %v25 = vld [vmem:[%s1] sm:$0xff]
  %v26 = vld [vmem:[%s1 + $0x8] sm:$0xff]
  %v27 = vld [vmem:[%s1 + $0x10] sm:$0xff]
  %v28 = vld [vmem:[%s1 + $0x18] sm:$0xff]
  %v29 = vld [vmem:[%s1 + $0x20] sm:$0x1]
  %v30 = vld [vmem:[%s1 + $0x21] sm:$0x1]
  %v31 = vld [vmem:[%s2] sm:$0xff]
  %v32 = vld [vmem:[%s5] sm:$0x1]
  %v33 = vlaneseq
  %v34 = vshrl.u32 %v33, 7
  %v35 = vsub.s32 0, %v34
  %v36 = vrot.slane %v32, %v35
  %vm37 = vcmask 64512
  %v39 = vsel %vm37, %v23, 0
  %v42 = vsel %vm37, %v24, 0
  %44 = vmatprep.subr.mxu0 0.0
  %45 = vmatpush1.msra.mxu0 %v31
  %46 = vmatprep.subr.mxu0 0.0
  %47 = vmatpush1.msra.mxu0 0.0
  %48 = vmatprep.subr.mxu0 0.0
  %49 = vmatpush1.msra.mxu0 0.0
  %50 = vmatprep.subr.mxu0 0.0
  %51 = vmatpush1.msra.mxu0 0.0
  %52 = vmatprep.subr.mxu0 0.0
  %53 = vmatpush1.msra.mxu0 0.0
  %54 = vmatprep.subr.mxu0 0.0
  %55 = vmatpush1.msra.mxu0 0.0
  %56 = vmatprep.subr.mxu0 0.0
  %57 = vmatpush1.msra.mxu0 0.0
  %58 = vmatprep.subr.mxu0 0.0
  %59 = vmatpush1.msra.mxu0 0.0
  %60 = vmatprep.subr.mxu0 0.0
  %61 = vmatpush1.msra.mxu0 0.0
  %62 = vmatprep.subr.mxu0 0.0
  %63 = vmatpush1.msra.mxu0 0.0
  %64 = vmatprep.subr.mxu0 0.0
  %65 = vmatpush1.msra.mxu0 0.0
  %66 = vmatprep.subr.mxu0 0.0
  %67 = vmatpush1.msra.mxu0 0.0
  %68 = vmatprep.subr.mxu0 0.0
  %69 = vmatpush1.msra.mxu0 0.0
  %70 = vmatprep.subr.mxu0 0.0
  %71 = vmatpush1.msra.mxu0 0.0
  %72 = vmatprep.subr.mxu0 0.0
  %73 = vmatpush1.msra.mxu0 0.0
  %74 = vmatprep.subr.mxu0 0.0
  %75 = vmatpush1.msra.mxu0 0.0
  %76 = vmatprep.subr.mxu0 0.0
  %77 = vmatpush1.msra.mxu0 0.0
  %78 = vmatprep.subr.mxu0 0.0
  %79 = vmatpush1.msra.mxu0 0.0
  %80 = vmatprep.subr.mxu0 0.0
  %81 = vmatpush1.msra.mxu0 0.0
  %82 = vmatprep.subr.mxu0 0.0
  %83 = vmatpush1.msra.mxu0 0.0
  %84 = vmatprep.subr.mxu0 0.0
  %85 = vmatpush1.msra.mxu0 0.0
  %86 = vmatprep.subr.mxu0 0.0
  %87 = vmatpush1.msra.mxu0 0.0
  %88 = vmatprep.subr.mxu0 0.0
  %89 = vmatpush1.msra.mxu0 0.0
  %90 = vmatprep.subr.mxu0 0.0
  %91 = vmatpush1.msra.mxu0 0.0
  %92 = vmatprep.subr.mxu0 0.0
  %93 = vmatpush1.msra.mxu0 0.0
  %94 = vmatprep.subr.mxu0 0.0
  %95 = vmatpush1.msra.mxu0 0.0
  %96 = vmatprep.subr.mxu0 0.0
  %97 = vmatpush1.msra.mxu0 0.0
  %98 = vmatprep.subr.mxu0 0.0
  %99 = vmatpush1.msra.mxu0 0.0
  %100 = vmatprep.subr.mxu0 0.0
  %101 = vmatpush1.msra.mxu0 0.0
  %102 = vmatprep.subr.mxu0 0.0
  %103 = vmatpush1.msra.mxu0 0.0
  %104 = vmatprep.subr.mxu0 0.0
  %105 = vmatpush1.msra.mxu0 0.0
  %106 = vmatprep.subr.mxu0 0.0
  %107 = vmatpush1.msra.mxu0 0.0
  %108 = vmatprep.mubr.f32.mxu0 0.0
  %109 = vmatmul.mubr.f32.gmra.mrb[0].mxu0 %v39
  %v110 = vpop.f32.mrb[0].mxu0
  %v111 = vadd.f32 %v36, %v110
  %v112 = vpop.f32.mrb[0].mxu0
  %113 = vmatprep.mubr.f32.mxu0 0.0
  %114 = vmatmul.mubr.f32.gmra.mrb[0].mxu0 %v42
  %v115 = vpop.f32.mrb[0].mxu0
  %v116 = vadd.f32 %v36, %v115
  %v117 = vpop.f32.mrb[0].mxu0
  %118 = vdwg.mxu0
  %v119 = vmax.f32 %v111, 0.0
  %v120 = vmax.f32 %v116, 0.0
  %v121 = vlaneseq
  %v122 = vand.u32 %v121, 127
  %123 = vset.pattern.permute.xlu0 0
  %124 = vperm.xlu0 %123, %v25
  %v125 = vpop.permute.xlu0 %124
  %126 = vset.pattern.permute.xlu0 0
  %127 = vperm.xlu0 %126, %v26
  %v128 = vpop.permute.xlu0 %127
  %129 = vset.pattern.permute.xlu0 0
  %130 = vperm.xlu0 %129, %v27
  %v131 = vpop.permute.xlu0 %130
  %132 = vset.pattern.permute.xlu0 0
  %133 = vperm.xlu0 %132, %v28
  %v134 = vpop.permute.xlu0 %133
  %vm135 = vcmp.eq.s32.totalorder %v122, %v125
  %vm136 = vcmp.eq.s32.totalorder %v122, %v128
  %vm137 = vcmp.eq.s32.totalorder %v122, %v131
  %vm138 = vcmp.eq.s32.totalorder %v122, %v134
  %v139 = vsel %vm135, 1, 0
  %v140 = vsel %vm136, 1, 0
  %v141 = vsel %vm137, 1, 0
  %v142 = vsel %vm138, 1, 0
  %v143 = vcvt.s32.f32 %v139
  %v144 = vcvt.s32.f32 %v140
  %v145 = vcvt.s32.f32 %v141
  %v146 = vcvt.s32.f32 %v142
  %147 = vset.pattern.permute.xlu0 1
  %148 = vperm.xlu0 %147, %v25
  %v149 = vpop.permute.xlu0 %148
  %150 = vset.pattern.permute.xlu0 1
  %151 = vperm.xlu0 %150, %v26
  %v152 = vpop.permute.xlu0 %151
  %153 = vset.pattern.permute.xlu0 1
  %154 = vperm.xlu0 %153, %v27
  %v155 = vpop.permute.xlu0 %154
  %156 = vset.pattern.permute.xlu0 1
  %157 = vperm.xlu0 %156, %v28
  %v158 = vpop.permute.xlu0 %157
  %vm159 = vcmp.eq.s32.totalorder %v122, %v149
  %vm160 = vcmp.eq.s32.totalorder %v122, %v152
  %vm161 = vcmp.eq.s32.totalorder %v122, %v155
  %vm162 = vcmp.eq.s32.totalorder %v122, %v158
  %v163 = vsel %vm159, 1, 0
  %v164 = vsel %vm160, 1, 0
  %v165 = vsel %vm161, 1, 0
  %v166 = vsel %vm162, 1, 0
  %v167 = vcvt.s32.f32 %v163
  %v168 = vcvt.s32.f32 %v164
  %v169 = vcvt.s32.f32 %v165
  %v170 = vcvt.s32.f32 %v166
  %v171 = vlaneseq
  %v172 = vshrl.u32 %v171, 7
  %v173 = vadd.s32 %v172, 8
  %v174 = vlaneseq
  %v175 = vshrl.u32 %v174, 7
  %v176 = vsub.s32 0, %v175
  %v177 = vrot.slane %v29, %v176
  %vm178 = vcmp.eq.s32.totalorder %v172, %v177
  %vm179 = vcmp.eq.s32.totalorder %v173, %v177
  %v180 = vsel %vm178, 1, 0
  %v181 = vsel %vm179, 1, 0
  %v182 = vcvt.s32.f32 %v180
  %v183 = vcvt.s32.f32 %v181
  %188 = vrot.lane.b32.xlu0 %v167, 16
  %v189 = vpop.permute.xlu0 %188
  %190 = vrot.lane.b32.xlu0 %v168, 16
  %v191 = vpop.permute.xlu0 %190
  %192 = vrot.lane.b32.xlu0 %v169, 16
  %v193 = vpop.permute.xlu0 %192
  %194 = vrot.lane.b32.xlu0 %v170, 16
  %v195 = vpop.permute.xlu0 %194
  %vm200 = vcmask 130048
  %v201 = vsel %vm200, %v143, %v189
  %v202 = vsel %vm200, %v144, %v191
  %v203 = vsel %vm200, %v145, %v193
  %v204 = vsel %vm200, %v146, %v195
  %207 = vrot.lane.b32.xlu0 %v111, 96
  %v208 = vpop.permute.xlu0 %207
  %209 = vrot.lane.b32.xlu0 %v116, 96
  %v210 = vpop.permute.xlu0 %209
  %211 = vrot.lane.b32.xlu0 %v208, 96
  %v212 = vpop.permute.xlu0 %211
  %213 = vrot.lane.b32.xlu0 %v210, 96
  %v214 = vpop.permute.xlu0 %213
  %vm219 = vcmask 261120
  %v221 = vsel %vm219, %v201, 0
  %v224 = vsel %vm219, %v202, 0
  %v227 = vsel %vm219, %v203, 0
  %v230 = vsel %vm219, %v204, 0
  %232 = vmatprep.subr.mxu0 0.0
  %233 = vmatpush1.msra.mxu0 %v208
  %234 = vmatprep.subr.mxu0 0.0
  %235 = vmatpush1.msra.mxu0 %v210
  %236 = vmatprep.subr.mxu0 0.0
  %237 = vmatpush1.msra.mxu0 %v212
  %238 = vmatprep.subr.mxu0 0.0
  %239 = vmatpush1.msra.mxu0 %v214
  %240 = vmatprep.subr.mxu0 0.0
  %241 = vmatpush1.msra.mxu0 0.0
  %242 = vmatprep.subr.mxu0 0.0
  %243 = vmatpush1.msra.mxu0 0.0
  %244 = vmatprep.subr.mxu0 0.0
  %245 = vmatpush1.msra.mxu0 0.0
  %246 = vmatprep.subr.mxu0 0.0
  %247 = vmatpush1.msra.mxu0 0.0
  %248 = vmatprep.subr.mxu0 0.0
  %249 = vmatpush1.msra.mxu0 0.0
  %250 = vmatprep.subr.mxu0 0.0
  %251 = vmatpush1.msra.mxu0 0.0
  %252 = vmatprep.subr.mxu0 0.0
  %253 = vmatpush1.msra.mxu0 0.0
  %254 = vmatprep.subr.mxu0 0.0
  %255 = vmatpush1.msra.mxu0 0.0
  %256 = vmatprep.subr.mxu0 0.0
  %257 = vmatpush1.msra.mxu0 0.0
  %258 = vmatprep.subr.mxu0 0.0
  %259 = vmatpush1.msra.mxu0 0.0
  %260 = vmatprep.subr.mxu0 0.0
  %261 = vmatpush1.msra.mxu0 0.0
  %262 = vmatprep.subr.mxu0 0.0
  %263 = vmatpush1.msra.mxu0 0.0
  %264 = vmatprep.subr.mxu0 0.0
  %265 = vmatpush1.msra.mxu0 0.0
  %266 = vmatprep.subr.mxu0 0.0
  %267 = vmatpush1.msra.mxu0 0.0
  %268 = vmatprep.subr.mxu0 0.0
  %269 = vmatpush1.msra.mxu0 0.0
  %270 = vmatprep.subr.mxu0 0.0
  %271 = vmatpush1.msra.mxu0 0.0
  %272 = vmatprep.subr.mxu0 0.0
  %273 = vmatpush1.msra.mxu0 0.0
  %274 = vmatprep.subr.mxu0 0.0
  %275 = vmatpush1.msra.mxu0 0.0
  %276 = vmatprep.subr.mxu0 0.0
  %277 = vmatpush1.msra.mxu0 0.0
  %278 = vmatprep.subr.mxu0 0.0
  %279 = vmatpush1.msra.mxu0 0.0
  %280 = vmatprep.subr.mxu0 0.0
  %281 = vmatpush1.msra.mxu0 0.0
  %282 = vmatprep.subr.mxu0 0.0
  %283 = vmatpush1.msra.mxu0 0.0
  %284 = vmatprep.subr.mxu0 0.0
  %285 = vmatpush1.msra.mxu0 0.0
  %286 = vmatprep.subr.mxu0 0.0
  %287 = vmatpush1.msra.mxu0 0.0
  %288 = vmatprep.subr.mxu0 0.0
  %289 = vmatpush1.msra.mxu0 0.0
  %290 = vmatprep.subr.mxu0 0.0
  %291 = vmatpush1.msra.mxu0 0.0
  %292 = vmatprep.subr.mxu0 0.0
  %293 = vmatpush1.msra.mxu0 0.0
  %294 = vmatprep.subr.mxu0 0.0
  %295 = vmatpush1.msra.mxu0 0.0
  %296 = vmatprep.mubr.f32.mxu0 0.0
  %297 = vmatmul.mubr.f32.gmra.mrb[0].mxu0 %v221
  %v298 = vpop.f32.mrb[0].mxu0
  %v299 = vadd.f32 0.0, %v298
  %v300 = vpop.f32.mrb[0].mxu0
  %301 = vmatprep.mubr.f32.mxu0 0.0
  %302 = vmatmul.mubr.f32.gmra.mrb[0].mxu0 %v224
  %v303 = vpop.f32.mrb[0].mxu0
  %v304 = vadd.f32 0.0, %v303
  %v305 = vpop.f32.mrb[0].mxu0
  %306 = vmatprep.mubr.f32.mxu0 0.0
  %307 = vmatmul.mubr.f32.gmra.mrb[0].mxu0 %v227
  %v308 = vpop.f32.mrb[0].mxu0
  %v309 = vadd.f32 0.0, %v308
  %v310 = vpop.f32.mrb[0].mxu0
  %311 = vmatprep.mubr.f32.mxu0 0.0
  %312 = vmatmul.mubr.f32.gmra.mrb[0].mxu0 %v230
  %v313 = vpop.f32.mrb[0].mxu0
  %v314 = vadd.f32 0.0, %v313
  %v315 = vpop.f32.mrb[0].mxu0
  %316 = vdwg.mxu0
  %v317 = vmax.f32 %v299, 0.0
  %v318 = vmax.f32 %v304, 0.0
  %v319 = vmax.f32 %v309, 0.0
  %v320 = vmax.f32 %v314, 0.0
  %v321 = vld [vmem:[%s5 + $0x2] sm:$0x1]
  %v322 = vlaneseq
  %v323 = vshrl.u32 %v322, 7
  %v324 = vsub.s32 0, %v323
  %v325 = vrot.slane %v321, %v324
  %v326 = vmul.f32 %v119, %v325
  %v327 = vmul.f32 %v120, %v325
  %v328 = vsel %vm219, %v326, 0.0
  %329 = vadd.xlane.f32.xlu0 %v328
  %v330 = vpop.xlane.xlu0 %329
  %v331 = vsel %vm219, %v327, 0.0
  %332 = vadd.xlane.f32.xlu0 %v331
  %v333 = vpop.xlane.xlu0 %332
  %v334 = vld [vmem:[%s5 + $0x1] sm:$0x1]
  %v335 = vlaneseq
  %v336 = vshrl.u32 %v335, 7
  %v337 = vsub.s32 0, %v336
  %v338 = vrot.slane %v334, %v337
  %v339 = vadd.f32 %v330, %v338
  %v340 = vadd.f32 %v333, %v338
  %v341 = vld [vmem:[%s5 + $0x3] sm:$0x1]
  %v342 = vlaneseq
  %v343 = vshrl.u32 %v342, 7
  %v344 = vsub.s32 0, %v343
  %v345 = vrot.slane %v341, %v344
  %v346 = vmul.f32 %v317, %v345
  %v347 = vmul.f32 %v318, %v345
  %v348 = vmul.f32 %v319, %v345
  %v349 = vmul.f32 %v320, %v345
  %v350 = vsel %vm219, %v346, 0.0
  %351 = vadd.xlane.f32.xlu0 %v350
  %v352 = vpop.xlane.xlu0 %351
  %v353 = vsel %vm219, %v347, 0.0
  %354 = vadd.xlane.f32.xlu0 %v353
  %v355 = vpop.xlane.xlu0 %354
  %v356 = vsel %vm219, %v348, 0.0
  %357 = vadd.xlane.f32.xlu0 %v356
  %v358 = vpop.xlane.xlu0 %357
  %v359 = vsel %vm219, %v349, 0.0
  %360 = vadd.xlane.f32.xlu0 %v359
  %v361 = vpop.xlane.xlu0 %360
  %v362 = vadd.f32 %v352, %v338
  %v363 = vadd.f32 %v355, %v338
  %v364 = vadd.f32 %v358, %v338
  %v365 = vadd.f32 %v361, %v338
  %v366 = vsub.f32 0.0, %v339
  %v367 = vsub.f32 0.0, %v340
  %v368 = vmul.f32 %v366, 1.442695
  %v369 = vpow.pop %v368
  %v370 = vmul.f32 %v367, 1.442695
  %v371 = vpow.pop %v370
  %v372 = vadd.f32 %v369, 1.0
  %v373 = vadd.f32 %v371, 1.0
  %v374 = vrcp.pop %v372
  %v375 = vmul.f32 1.0, %v374
  %v376 = vrcp.pop %v373
  %v377 = vmul.f32 1.0, %v376
  %v378 = vsub.f32 1.0, %v375
  %v379 = vsub.f32 1.0, %v377
  %v380 = vsub.f32 0.0, %v362
  %v381 = vsub.f32 0.0, %v363
  %v382 = vsub.f32 0.0, %v364
  %v383 = vsub.f32 0.0, %v365
  %v384 = vmul.f32 %v380, 1.442695
  %v385 = vpow.pop %v384
  %v386 = vmul.f32 %v381, 1.442695
  %v387 = vpow.pop %v386
  %v388 = vmul.f32 %v382, 1.442695
  %v389 = vpow.pop %v388
  %v390 = vmul.f32 %v383, 1.442695
  %v391 = vpow.pop %v390
  %v392 = vadd.f32 %v385, 1.0
  %v393 = vadd.f32 %v387, 1.0
  %v394 = vadd.f32 %v389, 1.0
  %v395 = vadd.f32 %v391, 1.0
  %v396 = vrcp.pop %v392
  %v397 = vmul.f32 1.0, %v396
  %v398 = vrcp.pop %v393
  %v399 = vmul.f32 1.0, %v398
  %v400 = vrcp.pop %v394
  %v401 = vmul.f32 1.0, %v400
  %v402 = vrcp.pop %v395
  %v403 = vmul.f32 1.0, %v402
  %v404 = vsub.f32 1.0, %v397
  %v405 = vsub.f32 1.0, %v399
  %v406 = vsub.f32 1.0, %v401
  %v407 = vsub.f32 1.0, %v403
  %409 = vset.pattern.permute.xlu0 1
  %410 = vperm.xlu0 %409, %v397
  %v411 = vpop.permute.xlu0 %410
  %414 = vset.pattern.permute.xlu0 1
  %415 = vperm.xlu0 %414, %v399
  %v416 = vpop.permute.xlu0 %415
  %419 = vset.pattern.permute.xlu0 1
  %420 = vperm.xlu0 %419, %v401
  %v421 = vpop.permute.xlu0 %420
  %424 = vset.pattern.permute.xlu0 1
  %425 = vperm.xlu0 %424, %v403
  %v426 = vpop.permute.xlu0 %425
  %v428 = vmul.f32 %v143, %v411
  %v429 = vmul.f32 %v144, %v416
  %v430 = vmul.f32 %v145, %v421
  %v431 = vmul.f32 %v146, %v426
  %433 = vset.pattern.permute.xlu0 1
  %434 = vperm.xlu0 %433, %v404
  %v435 = vpop.permute.xlu0 %434
  %438 = vset.pattern.permute.xlu0 1
  %439 = vperm.xlu0 %438, %v405
  %v440 = vpop.permute.xlu0 %439
  %443 = vset.pattern.permute.xlu0 1
  %444 = vperm.xlu0 %443, %v406
  %v445 = vpop.permute.xlu0 %444
  %448 = vset.pattern.permute.xlu0 1
  %449 = vperm.xlu0 %448, %v407
  %v450 = vpop.permute.xlu0 %449
  %v452 = vmul.f32 %v143, %v435
  %v453 = vmul.f32 %v144, %v440
  %v454 = vmul.f32 %v145, %v445
  %v455 = vmul.f32 %v146, %v450
  %460 = vrot.lane.b32.xlu0 %v452, 16
  %v461 = vpop.permute.xlu0 %460
  %462 = vrot.lane.b32.xlu0 %v453, 16
  %v463 = vpop.permute.xlu0 %462
  %464 = vrot.lane.b32.xlu0 %v454, 16
  %v465 = vpop.permute.xlu0 %464
  %466 = vrot.lane.b32.xlu0 %v455, 16
  %v467 = vpop.permute.xlu0 %466
  %v472 = vsel %vm200, %v428, %v461
  %v473 = vsel %vm200, %v429, %v463
  %v474 = vsel %vm200, %v430, %v465
  %v475 = vsel %vm200, %v431, %v467
  %v477 = vsel %vm219, %v182, 0
  %v480 = vsel %vm219, %v183, 0
  %482 = vmatprep.subr.mxu0 0.0
  %483 = vmatpush1.msra.mxu0 %v472
  %484 = vmatprep.subr.mxu0 0.0
  %485 = vmatpush1.msra.mxu0 %v473
  %486 = vmatprep.subr.mxu0 0.0
  %487 = vmatpush1.msra.mxu0 %v474
  %488 = vmatprep.subr.mxu0 0.0
  %489 = vmatpush1.msra.mxu0 %v475
  %490 = vmatprep.subr.mxu0 0.0
  %491 = vmatpush1.msra.mxu0 0.0
  %492 = vmatprep.subr.mxu0 0.0
  %493 = vmatpush1.msra.mxu0 0.0
  %494 = vmatprep.subr.mxu0 0.0
  %495 = vmatpush1.msra.mxu0 0.0
  %496 = vmatprep.subr.mxu0 0.0
  %497 = vmatpush1.msra.mxu0 0.0
  %498 = vmatprep.subr.mxu0 0.0
  %499 = vmatpush1.msra.mxu0 0.0
  %500 = vmatprep.subr.mxu0 0.0
  %501 = vmatpush1.msra.mxu0 0.0
  %502 = vmatprep.subr.mxu0 0.0
  %503 = vmatpush1.msra.mxu0 0.0
  %504 = vmatprep.subr.mxu0 0.0
  %505 = vmatpush1.msra.mxu0 0.0
  %506 = vmatprep.subr.mxu0 0.0
  %507 = vmatpush1.msra.mxu0 0.0
  %508 = vmatprep.subr.mxu0 0.0
  %509 = vmatpush1.msra.mxu0 0.0
  %510 = vmatprep.subr.mxu0 0.0
  %511 = vmatpush1.msra.mxu0 0.0
  %512 = vmatprep.subr.mxu0 0.0
  %513 = vmatpush1.msra.mxu0 0.0
  %514 = vmatprep.subr.mxu0 0.0
  %515 = vmatpush1.msra.mxu0 0.0
  %516 = vmatprep.subr.mxu0 0.0
  %517 = vmatpush1.msra.mxu0 0.0
  %518 = vmatprep.subr.mxu0 0.0
  %519 = vmatpush1.msra.mxu0 0.0
  %520 = vmatprep.subr.mxu0 0.0
  %521 = vmatpush1.msra.mxu0 0.0
  %522 = vmatprep.subr.mxu0 0.0
  %523 = vmatpush1.msra.mxu0 0.0
  %524 = vmatprep.subr.mxu0 0.0
  %525 = vmatpush1.msra.mxu0 0.0
  %526 = vmatprep.subr.mxu0 0.0
  %527 = vmatpush1.msra.mxu0 0.0
  %528 = vmatprep.subr.mxu0 0.0
  %529 = vmatpush1.msra.mxu0 0.0
  %530 = vmatprep.subr.mxu0 0.0
  %531 = vmatpush1.msra.mxu0 0.0
  %532 = vmatprep.subr.mxu0 0.0
  %533 = vmatpush1.msra.mxu0 0.0
  %534 = vmatprep.subr.mxu0 0.0
  %535 = vmatpush1.msra.mxu0 0.0
  %536 = vmatprep.subr.mxu0 0.0
  %537 = vmatpush1.msra.mxu0 0.0
  %538 = vmatprep.subr.mxu0 0.0
  %539 = vmatpush1.msra.mxu0 0.0
  %540 = vmatprep.subr.mxu0 0.0
  %541 = vmatpush1.msra.mxu0 0.0
  %542 = vmatprep.subr.mxu0 0.0
  %543 = vmatpush1.msra.mxu0 0.0
  %544 = vmatprep.subr.mxu0 0.0
  %545 = vmatpush1.msra.mxu0 0.0
  %546 = vmatprep.mubr.f32.mxu0 0.0
  %547 = vmatmul.mubr.f32.gmra.mrb[0].mxu0 %v477
  %v548 = vpop.f32.mrb[0].mxu0
  %v549 = vadd.f32 0.0, %v548
  %v550 = vpop.f32.mrb[0].mxu0
  %551 = vmatprep.mubr.f32.mxu0 0.0
  %552 = vmatmul.mubr.f32.gmra.mrb[0].mxu0 %v480
  %v553 = vpop.f32.mrb[0].mxu0
  %v554 = vadd.f32 0.0, %v553
  %v555 = vpop.f32.mrb[0].mxu0
  %556 = vdwg.mxu0
  %v557 = vsel %vm200, %v549, 0.0
  %v558 = vsel %vm200, %v554, 0.0
  %v559 = vsel %vm200, 0.0, %v549
  %v560 = vsel %vm200, 0.0, %v554
  %v561 = vadd.s32 %v172, 16
  %v562 = vadd.s32 %v172, 24
  %vm563 = vcmp.eq.s32.totalorder %v172, %v122
  %vm564 = vcmp.eq.s32.totalorder %v173, %v122
  %vm565 = vcmp.eq.s32.totalorder %v561, %v122
  %vm566 = vcmp.eq.s32.totalorder %v562, %v122
  %v567 = vsel %vm563, 1, 0
  %v568 = vsel %vm564, 1, 0
  %v569 = vsel %vm565, 1, 0
  %v570 = vsel %vm566, 1, 0
  %v571 = vcvt.s32.f32 %v567
  %v572 = vcvt.s32.f32 %v568
  %v573 = vcvt.s32.f32 %v569
  %v574 = vcvt.s32.f32 %v570
  %v575 = vadd.f32 %v557, %v571
  %v576 = vadd.f32 %v558, %v572
  %v577 = vadd.f32 %v559, %v573
  %v578 = vadd.f32 %v560, %v574
  %v579 = vsel %vm219, %v575, 0.0
  %v580 = vsel %vm219, %v576, 0.0
  %v581 = vadd.f32 %v579, %v580
  %v582 = vsel %vm219, %v577, 0.0
  %v583 = vadd.f32 %v581, %v582
  %v584 = vsel %vm219, %v578, 0.0
  %v585 = vadd.f32 %v583, %v584
  %v586 = vrot.slane %v585, 4
  %v587 = vadd.f32 %v585, %v586
  %v588 = vrot.slane %v587, 2
  %v589 = vadd.f32 %v587, %v588
  %v590 = vrot.slane %v589, 1
  %v591 = vadd.f32 %v589, %v590
  %vm592 = vcmp.gt.f32.partialorder %v591, 0.0
  %v593 = vrsqrt.pop %v591
  %v594 = vsel %vm592, %v593, 0.0
  %v595 = vmul.f32 %v571, %v594
  %v596 = vmul.f32 %v572, %v594
  %v597 = vmul.f32 %v573, %v594
  %v598 = vmul.f32 %v574, %v594
  %v599 = vsel %vm219, %v595, 0.0
  %600 = vadd.xlane.f32.xlu0 %v599
  %v601 = vpop.xlane.xlu0 %600
  %v602 = vsel %vm219, %v596, 0.0
  %603 = vadd.xlane.f32.xlu0 %v602
  %v604 = vpop.xlane.xlu0 %603
  %v605 = vsel %vm219, %v597, 0.0
  %606 = vadd.xlane.f32.xlu0 %v605
  %v607 = vpop.xlane.xlu0 %606
  %v608 = vsel %vm219, %v598, 0.0
  %609 = vadd.xlane.f32.xlu0 %v608
  %v610 = vpop.xlane.xlu0 %609
  %v611 = vmul.f32 %v601, %v575
  %v612 = vmul.f32 %v604, %v576
  %v613 = vmul.f32 %v607, %v577
  %v614 = vmul.f32 %v610, %v578
  %v615 = vmul.f32 %v611, %v594
  %v616 = vmul.f32 %v612, %v594
  %v617 = vmul.f32 %v613, %v594
  %v618 = vmul.f32 %v614, %v594
  %vm619 = vcmp.lt.s32.totalorder %v172, 16
  %vm620 = vcmp.lt.s32.totalorder %v173, 16
  %vm621 = vcmp.lt.s32.totalorder %v561, 16
  %vm622 = vcmp.lt.s32.totalorder %v562, 16
  %624 = vset.pattern.permute.xlu0 0
  %625 = vperm.xlu0 %624, %v375
  %v626 = vpop.permute.xlu0 %625
  %629 = vset.pattern.permute.xlu0 0
  %630 = vperm.xlu0 %629, %v377
  %v631 = vpop.permute.xlu0 %630
  %v633 = vmul.f32 %v626, %v23
  %v634 = vmul.f32 %v631, %v24
  %636 = vset.pattern.permute.xlu0 0
  %637 = vperm.xlu0 %636, %v378
  %v638 = vpop.permute.xlu0 %637
  %641 = vset.pattern.permute.xlu0 0
  %642 = vperm.xlu0 %641, %v379
  %v643 = vpop.permute.xlu0 %642
  %v645 = vmul.f32 %v638, %v23
  %v646 = vmul.f32 %v643, %v24
  %v647 = vld [vmem:[%s2] sm:$0xff]
  %v648 = vld [vmem:[%s2 + $0x8] sm:$0xff]
  %v649 = vld [vmem:[%s5 + $0x4] sm:$0x1]
  %v650 = vsel %vm37, %v633, 0.0
  %v651 = vsel %vm37, %v634, 0.0
  %v652 = vadd.f32 %v650, %v651
  %v653 = vrot.slane %v652, 4
  %v654 = vadd.f32 %v652, %v653
  %v655 = vrot.slane %v654, 2
  %v656 = vadd.f32 %v654, %v655
  %v657 = vrot.slane %v656, 1
  %v658 = vadd.f32 %v656, %v657
  %v659 = vrcp.pop 16.0
  %v660 = vmul.f32 %v658, %v659
  %v661 = vsub.f32 %v633, %v660
  %v662 = vsub.f32 %v634, %v660
  %v663 = vmul.f32 %v661, %v661
  %v664 = vmul.f32 %v662, %v662
  %v665 = vsel %vm37, %v663, 0.0
  %v666 = vsel %vm37, %v664, 0.0
  %v667 = vadd.f32 %v665, %v666
  %v668 = vrot.slane %v667, 4
  %v669 = vadd.f32 %v667, %v668
  %v670 = vrot.slane %v669, 2
  %v671 = vadd.f32 %v669, %v670
  %v672 = vrot.slane %v671, 1
  %v673 = vadd.f32 %v671, %v672
  %v674 = vmul.f32 %v673, %v659
  %v675 = vadd.f32 %v674, 1e-05
  %v676 = vrsqrt.pop %v675
  %v677 = vmul.f32 %v661, %v676
  %v678 = vmul.f32 %v662, %v676
  %v679 = vadd.f32 %v677, 0.0001
  %v680 = vadd.f32 %v678, 0.0001
  %v681 = vsel %vm37, %v645, 0.0
  %v682 = vsel %vm37, %v646, 0.0
  %v683 = vadd.f32 %v681, %v682
  %v684 = vrot.slane %v683, 4
  %v685 = vadd.f32 %v683, %v684
  %v686 = vrot.slane %v685, 2
  %v687 = vadd.f32 %v685, %v686
  %v688 = vrot.slane %v687, 1
  %v689 = vadd.f32 %v687, %v688
  %v690 = vmul.f32 %v689, %v659
  %v691 = vsub.f32 %v645, %v690
  %v692 = vsub.f32 %v646, %v690
  %v693 = vmul.f32 %v691, %v691
  %v694 = vmul.f32 %v692, %v692
  %v695 = vsel %vm37, %v693, 0.0
  %v696 = vsel %vm37, %v694, 0.0
  %v697 = vadd.f32 %v695, %v696
  %v698 = vrot.slane %v697, 4
  %v699 = vadd.f32 %v697, %v698
  %v700 = vrot.slane %v699, 2
  %v701 = vadd.f32 %v699, %v700
  %v702 = vrot.slane %v701, 1
  %v703 = vadd.f32 %v701, %v702
  %v704 = vmul.f32 %v703, %v659
  %v705 = vadd.f32 %v704, 1e-05
  %v706 = vrsqrt.pop %v705
  %v707 = vmul.f32 %v691, %v706
  %v708 = vmul.f32 %v692, %v706
  %v709 = vadd.f32 %v707, 0.0001
  %v710 = vadd.f32 %v708, 0.0001
  %713 = vrot.lane.b32.xlu0 %v647, 32
  %v714 = vpop.permute.xlu0 %713
  %715 = vrot.lane.b32.xlu0 %v648, 32
  %v716 = vpop.permute.xlu0 %715
  %v717 = vsel %vm219, %v714, %v716
  %v720 = vsel %vm37, %v679, 0
  %v723 = vsel %vm37, %v680, 0
  %v726 = vsel %vm37, %v709, 0
  %v729 = vsel %vm37, %v710, 0
  %731 = vmatprep.subr.mxu0 0.0
  %732 = vmatpush1.msra.mxu0 %v717
  %733 = vmatprep.subr.mxu0 0.0
  %734 = vmatpush1.msra.mxu0 0.0
  %735 = vmatprep.subr.mxu0 0.0
  %736 = vmatpush1.msra.mxu0 0.0
  %737 = vmatprep.subr.mxu0 0.0
  %738 = vmatpush1.msra.mxu0 0.0
  %739 = vmatprep.subr.mxu0 0.0
  %740 = vmatpush1.msra.mxu0 0.0
  %741 = vmatprep.subr.mxu0 0.0
  %742 = vmatpush1.msra.mxu0 0.0
  %743 = vmatprep.subr.mxu0 0.0
  %744 = vmatpush1.msra.mxu0 0.0
  %745 = vmatprep.subr.mxu0 0.0
  %746 = vmatpush1.msra.mxu0 0.0
  %747 = vmatprep.subr.mxu0 0.0
  %748 = vmatpush1.msra.mxu0 0.0
  %749 = vmatprep.subr.mxu0 0.0
  %750 = vmatpush1.msra.mxu0 0.0
  %751 = vmatprep.subr.mxu0 0.0
  %752 = vmatpush1.msra.mxu0 0.0
  %753 = vmatprep.subr.mxu0 0.0
  %754 = vmatpush1.msra.mxu0 0.0
  %755 = vmatprep.subr.mxu0 0.0
  %756 = vmatpush1.msra.mxu0 0.0
  %757 = vmatprep.subr.mxu0 0.0
  %758 = vmatpush1.msra.mxu0 0.0
  %759 = vmatprep.subr.mxu0 0.0
  %760 = vmatpush1.msra.mxu0 0.0
  %761 = vmatprep.subr.mxu0 0.0
  %762 = vmatpush1.msra.mxu0 0.0
  %763 = vmatprep.subr.mxu0 0.0
  %764 = vmatpush1.msra.mxu0 0.0
  %765 = vmatprep.subr.mxu0 0.0
  %766 = vmatpush1.msra.mxu0 0.0
  %767 = vmatprep.subr.mxu0 0.0
  %768 = vmatpush1.msra.mxu0 0.0
  %769 = vmatprep.subr.mxu0 0.0
  %770 = vmatpush1.msra.mxu0 0.0
  %771 = vmatprep.subr.mxu0 0.0
  %772 = vmatpush1.msra.mxu0 0.0
  %773 = vmatprep.subr.mxu0 0.0
  %774 = vmatpush1.msra.mxu0 0.0
  %775 = vmatprep.subr.mxu0 0.0
  %776 = vmatpush1.msra.mxu0 0.0
  %777 = vmatprep.subr.mxu0 0.0
  %778 = vmatpush1.msra.mxu0 0.0
  %779 = vmatprep.subr.mxu0 0.0
  %780 = vmatpush1.msra.mxu0 0.0
  %781 = vmatprep.subr.mxu0 0.0
  %782 = vmatpush1.msra.mxu0 0.0
  %783 = vmatprep.subr.mxu0 0.0
  %784 = vmatpush1.msra.mxu0 0.0
  %785 = vmatprep.subr.mxu0 0.0
  %786 = vmatpush1.msra.mxu0 0.0
  %787 = vmatprep.subr.mxu0 0.0
  %788 = vmatpush1.msra.mxu0 0.0
  %789 = vmatprep.subr.mxu0 0.0
  %790 = vmatpush1.msra.mxu0 0.0
  %791 = vmatprep.subr.mxu0 0.0
  %792 = vmatpush1.msra.mxu0 0.0
  %793 = vmatprep.subr.mxu0 0.0
  %794 = vmatpush1.msra.mxu0 0.0
  %795 = vmatprep.mubr.f32.mxu0 0.0
  %796 = vmatmul.mubr.f32.gmra.mrb[0].mxu0 %v720
  %v797 = vpop.f32.mrb[0].mxu0
  %v798 = vadd.f32 0.0, %v797
  %v799 = vpop.f32.mrb[0].mxu0
  %800 = vmatprep.mubr.f32.mxu0 0.0
  %801 = vmatmul.mubr.f32.gmra.mrb[0].mxu0 %v723
  %v802 = vpop.f32.mrb[0].mxu0
  %v803 = vadd.f32 0.0, %v802
  %v804 = vpop.f32.mrb[0].mxu0
  %805 = vmatprep.mubr.f32.mxu0 0.0
  %806 = vmatmul.mubr.f32.gmra.mrb[0].mxu0 %v726
  %v807 = vpop.f32.mrb[0].mxu0
  %v808 = vadd.f32 0.0, %v807
  %v809 = vpop.f32.mrb[0].mxu0
  %810 = vmatprep.mubr.f32.mxu0 0.0
  %811 = vmatmul.mubr.f32.gmra.mrb[0].mxu0 %v729
  %v812 = vpop.f32.mrb[0].mxu0
  %v813 = vadd.f32 0.0, %v812
  %v814 = vpop.f32.mrb[0].mxu0
  %815 = vdwg.mxu0
  %820 = vrot.lane.b32.xlu0 %v798, 96
  %v821 = vpop.permute.xlu0 %820
  %822 = vrot.lane.b32.xlu0 %v803, 96
  %v823 = vpop.permute.xlu0 %822
  %824 = vrot.lane.b32.xlu0 %v808, 96
  %v825 = vpop.permute.xlu0 %824
  %826 = vrot.lane.b32.xlu0 %v813, 96
  %v827 = vpop.permute.xlu0 %826
  %v832 = vsel %vm619, %v798, %v821
  %v833 = vsel %vm620, %v803, %v823
  %v834 = vsel %vm621, %v808, %v825
  %v835 = vsel %vm622, %v813, %v827
  %v836 = vlaneseq
  %v837 = vshrl.u32 %v836, 7
  %v838 = vsub.s32 0, %v837
  %v839 = vrot.slane %v649, %v838
  %841 = vrot.lane.b32.xlu0 %v839, 96
  %v842 = vpop.permute.xlu0 %841
  %v844 = vsel %vm619, %v839, %v842
  %v845 = vsel %vm620, %v839, %v842
  %v846 = vsel %vm621, %v839, %v842
  %v847 = vsel %vm622, %v839, %v842
  %v849 = vsel %vm219, %v615, 0
  %v852 = vsel %vm219, %v616, 0
  %v855 = vsel %vm219, %v617, 0
  %v858 = vsel %vm219, %v618, 0
  %860 = vmatprep.subr.mxu0 0.0
  %861 = vmatpush1.msra.mxu0 %v832
  %862 = vmatprep.subr.mxu0 0.0
  %863 = vmatpush1.msra.mxu0 %v833
  %864 = vmatprep.subr.mxu0 0.0
  %865 = vmatpush1.msra.mxu0 %v834
  %866 = vmatprep.subr.mxu0 0.0
  %867 = vmatpush1.msra.mxu0 %v835
  %868 = vmatprep.subr.mxu0 0.0
  %869 = vmatpush1.msra.mxu0 0.0
  %870 = vmatprep.subr.mxu0 0.0
  %871 = vmatpush1.msra.mxu0 0.0
  %872 = vmatprep.subr.mxu0 0.0
  %873 = vmatpush1.msra.mxu0 0.0
  %874 = vmatprep.subr.mxu0 0.0
  %875 = vmatpush1.msra.mxu0 0.0
  %876 = vmatprep.subr.mxu0 0.0
  %877 = vmatpush1.msra.mxu0 0.0
  %878 = vmatprep.subr.mxu0 0.0
  %879 = vmatpush1.msra.mxu0 0.0
  %880 = vmatprep.subr.mxu0 0.0
  %881 = vmatpush1.msra.mxu0 0.0
  %882 = vmatprep.subr.mxu0 0.0
  %883 = vmatpush1.msra.mxu0 0.0
  %884 = vmatprep.subr.mxu0 0.0
  %885 = vmatpush1.msra.mxu0 0.0
  %886 = vmatprep.subr.mxu0 0.0
  %887 = vmatpush1.msra.mxu0 0.0
  %888 = vmatprep.subr.mxu0 0.0
  %889 = vmatpush1.msra.mxu0 0.0
  %890 = vmatprep.subr.mxu0 0.0
  %891 = vmatpush1.msra.mxu0 0.0
  %892 = vmatprep.subr.mxu0 0.0
  %893 = vmatpush1.msra.mxu0 0.0
  %894 = vmatprep.subr.mxu0 0.0
  %895 = vmatpush1.msra.mxu0 0.0
  %896 = vmatprep.subr.mxu0 0.0
  %897 = vmatpush1.msra.mxu0 0.0
  %898 = vmatprep.subr.mxu0 0.0
  %899 = vmatpush1.msra.mxu0 0.0
  %900 = vmatprep.subr.mxu0 0.0
  %901 = vmatpush1.msra.mxu0 0.0
  %902 = vmatprep.subr.mxu0 0.0
  %903 = vmatpush1.msra.mxu0 0.0
  %904 = vmatprep.subr.mxu0 0.0
  %905 = vmatpush1.msra.mxu0 0.0
  %906 = vmatprep.subr.mxu0 0.0
  %907 = vmatpush1.msra.mxu0 0.0
  %908 = vmatprep.subr.mxu0 0.0
  %909 = vmatpush1.msra.mxu0 0.0
  %910 = vmatprep.subr.mxu0 0.0
  %911 = vmatpush1.msra.mxu0 0.0
  %912 = vmatprep.subr.mxu0 0.0
  %913 = vmatpush1.msra.mxu0 0.0
  %914 = vmatprep.subr.mxu0 0.0
  %915 = vmatpush1.msra.mxu0 0.0
  %916 = vmatprep.subr.mxu0 0.0
  %917 = vmatpush1.msra.mxu0 0.0
  %918 = vmatprep.subr.mxu0 0.0
  %919 = vmatpush1.msra.mxu0 0.0
  %920 = vmatprep.subr.mxu0 0.0
  %921 = vmatpush1.msra.mxu0 0.0
  %922 = vmatprep.subr.mxu0 0.0
  %923 = vmatpush1.msra.mxu0 0.0
  %924 = vmatprep.mubr.f32.mxu0 0.0
  %925 = vmatmul.mubr.f32.gmra.mrb[0].mxu0 %v849
  %v926 = vpop.f32.mrb[0].mxu0
  %v927 = vadd.f32 %v844, %v926
  %v928 = vpop.f32.mrb[0].mxu0
  %929 = vmatprep.mubr.f32.mxu0 0.0
  %930 = vmatmul.mubr.f32.gmra.mrb[0].mxu0 %v852
  %v931 = vpop.f32.mrb[0].mxu0
  %v932 = vadd.f32 %v845, %v931
  %v933 = vpop.f32.mrb[0].mxu0
  %934 = vmatprep.mubr.f32.mxu0 0.0
  %935 = vmatmul.mubr.f32.gmra.mrb[0].mxu0 %v855
  %v936 = vpop.f32.mrb[0].mxu0
  %v937 = vadd.f32 %v846, %v936
  %v938 = vpop.f32.mrb[0].mxu0
  %939 = vmatprep.mubr.f32.mxu0 0.0
  %940 = vmatmul.mubr.f32.gmra.mrb[0].mxu0 %v858
  %v941 = vpop.f32.mrb[0].mxu0
  %v942 = vadd.f32 %v847, %v941
  %v943 = vpop.f32.mrb[0].mxu0
  %944 = vdwg.mxu0
  %v945 = vmax.f32 %v927, 0.0
  %v946 = vmax.f32 %v932, 0.0
  %v947 = vmax.f32 %v937, 0.0
  %v948 = vmax.f32 %v942, 0.0
  %v949 = vld [vmem:[%s3] sm:$0xff]
  %v950 = vld [vmem:[%s3 + $0x8] sm:$0xff]
  %v951 = vld [vmem:[%s3 + $0x10] sm:$0xff]
  %v952 = vld [vmem:[%s3 + $0x18] sm:$0xff]
  %v953 = vld [vmem:[%s5 + $0x5] sm:$0x1]
  %v954 = vsel %vm219, %v945, 0.0
  %v955 = vsel %vm219, %v946, 0.0
  %v956 = vadd.f32 %v954, %v955
  %v957 = vrot.slane %v956, 4
  %v958 = vadd.f32 %v956, %v957
  %v959 = vrot.slane %v958, 2
  %v960 = vadd.f32 %v958, %v959
  %v961 = vrot.slane %v960, 1
  %v962 = vadd.f32 %v960, %v961
  %v963 = vmul.f32 %v962, %v659
  %v964 = vsub.f32 %v945, %v963
  %v965 = vsub.f32 %v946, %v963
  %v966 = vmul.f32 %v964, %v964
  %v967 = vmul.f32 %v965, %v965
  %v968 = vsel %vm219, %v966, 0.0
  %v969 = vsel %vm219, %v967, 0.0
  %v970 = vadd.f32 %v968, %v969
  %v971 = vrot.slane %v970, 4
  %v972 = vadd.f32 %v970, %v971
  %v973 = vrot.slane %v972, 2
  %v974 = vadd.f32 %v972, %v973
  %v975 = vrot.slane %v974, 1
  %v976 = vadd.f32 %v974, %v975
  %v977 = vmul.f32 %v976, %v659
  %v978 = vadd.f32 %v977, 1e-05
  %v979 = vrsqrt.pop %v978
  %v980 = vmul.f32 %v964, %v979
  %v981 = vmul.f32 %v965, %v979
  %v982 = vadd.f32 %v980, 0.0001
  %v983 = vadd.f32 %v981, 0.0001
  %v984 = vsel %vm219, %v947, 0.0
  %v985 = vsel %vm219, %v948, 0.0
  %v986 = vadd.f32 %v984, %v985
  %v987 = vrot.slane %v986, 4
  %v988 = vadd.f32 %v986, %v987
  %v989 = vrot.slane %v988, 2
  %v990 = vadd.f32 %v988, %v989
  %v991 = vrot.slane %v990, 1
  %v992 = vadd.f32 %v990, %v991
  %v993 = vmul.f32 %v992, %v659
  %v994 = vsub.f32 %v947, %v993
  %v995 = vsub.f32 %v948, %v993
  %v996 = vmul.f32 %v994, %v994
  %v997 = vmul.f32 %v995, %v995
  %v998 = vsel %vm219, %v996, 0.0
  %v999 = vsel %vm219, %v997, 0.0
  %v1000 = vadd.f32 %v998, %v999
  %v1001 = vrot.slane %v1000, 4
  %v1002 = vadd.f32 %v1000, %v1001
  %v1003 = vrot.slane %v1002, 2
  %v1004 = vadd.f32 %v1002, %v1003
  %v1005 = vrot.slane %v1004, 1
  %v1006 = vadd.f32 %v1004, %v1005
  %v1007 = vmul.f32 %v1006, %v659
  %v1008 = vadd.f32 %v1007, 1e-05
  %v1009 = vrsqrt.pop %v1008
  %v1010 = vmul.f32 %v994, %v1009
  %v1011 = vmul.f32 %v995, %v1009
  %v1012 = vadd.f32 %v1010, 0.0001
  %v1013 = vadd.f32 %v1011, 0.0001
  %v1015 = vsel %vm219, %v982, 0
  %v1018 = vsel %vm219, %v983, 0
  %v1021 = vsel %vm219, %v1012, 0
  %v1024 = vsel %vm219, %v1013, 0
  %1026 = vmatprep.subr.mxu0 0.0
  %1027 = vmatpush1.msra.mxu0 %v949
  %1028 = vmatprep.subr.mxu0 0.0
  %1029 = vmatpush1.msra.mxu0 %v950
  %1030 = vmatprep.subr.mxu0 0.0
  %1031 = vmatpush1.msra.mxu0 %v951
  %1032 = vmatprep.subr.mxu0 0.0
  %1033 = vmatpush1.msra.mxu0 %v952
  %1034 = vmatprep.subr.mxu0 0.0
  %1035 = vmatpush1.msra.mxu0 0.0
  %1036 = vmatprep.subr.mxu0 0.0
  %1037 = vmatpush1.msra.mxu0 0.0
  %1038 = vmatprep.subr.mxu0 0.0
  %1039 = vmatpush1.msra.mxu0 0.0
  %1040 = vmatprep.subr.mxu0 0.0
  %1041 = vmatpush1.msra.mxu0 0.0
  %1042 = vmatprep.subr.mxu0 0.0
  %1043 = vmatpush1.msra.mxu0 0.0
  %1044 = vmatprep.subr.mxu0 0.0
  %1045 = vmatpush1.msra.mxu0 0.0
  %1046 = vmatprep.subr.mxu0 0.0
  %1047 = vmatpush1.msra.mxu0 0.0
  %1048 = vmatprep.subr.mxu0 0.0
  %1049 = vmatpush1.msra.mxu0 0.0
  %1050 = vmatprep.subr.mxu0 0.0
  %1051 = vmatpush1.msra.mxu0 0.0
  %1052 = vmatprep.subr.mxu0 0.0
  %1053 = vmatpush1.msra.mxu0 0.0
  %1054 = vmatprep.subr.mxu0 0.0
  %1055 = vmatpush1.msra.mxu0 0.0
  %1056 = vmatprep.subr.mxu0 0.0
  %1057 = vmatpush1.msra.mxu0 0.0
  %1058 = vmatprep.subr.mxu0 0.0
  %1059 = vmatpush1.msra.mxu0 0.0
  %1060 = vmatprep.subr.mxu0 0.0
  %1061 = vmatpush1.msra.mxu0 0.0
  %1062 = vmatprep.subr.mxu0 0.0
  %1063 = vmatpush1.msra.mxu0 0.0
  %1064 = vmatprep.subr.mxu0 0.0
  %1065 = vmatpush1.msra.mxu0 0.0
  %1066 = vmatprep.subr.mxu0 0.0
  %1067 = vmatpush1.msra.mxu0 0.0
  %1068 = vmatprep.subr.mxu0 0.0
  %1069 = vmatpush1.msra.mxu0 0.0
  %1070 = vmatprep.subr.mxu0 0.0
  %1071 = vmatpush1.msra.mxu0 0.0
  %1072 = vmatprep.subr.mxu0 0.0
  %1073 = vmatpush1.msra.mxu0 0.0
  %1074 = vmatprep.subr.mxu0 0.0
  %1075 = vmatpush1.msra.mxu0 0.0
  %1076 = vmatprep.subr.mxu0 0.0
  %1077 = vmatpush1.msra.mxu0 0.0
  %1078 = vmatprep.subr.mxu0 0.0
  %1079 = vmatpush1.msra.mxu0 0.0
  %1080 = vmatprep.subr.mxu0 0.0
  %1081 = vmatpush1.msra.mxu0 0.0
  %1082 = vmatprep.subr.mxu0 0.0
  %1083 = vmatpush1.msra.mxu0 0.0
  %1084 = vmatprep.subr.mxu0 0.0
  %1085 = vmatpush1.msra.mxu0 0.0
  %1086 = vmatprep.subr.mxu0 0.0
  %1087 = vmatpush1.msra.mxu0 0.0
  %1088 = vmatprep.subr.mxu0 0.0
  %1089 = vmatpush1.msra.mxu0 0.0
  %1090 = vmatprep.mubr.f32.mxu0 0.0
  %1091 = vmatmul.mubr.f32.gmra.mrb[0].mxu0 %v1015
  %v1092 = vpop.f32.mrb[0].mxu0
  %v1093 = vadd.f32 0.0, %v1092
  %v1094 = vpop.f32.mrb[0].mxu0
  %1095 = vmatprep.mubr.f32.mxu0 0.0
  %1096 = vmatmul.mubr.f32.gmra.mrb[0].mxu0 %v1018
  %v1097 = vpop.f32.mrb[0].mxu0
  %v1098 = vadd.f32 0.0, %v1097
  %v1099 = vpop.f32.mrb[0].mxu0
  %1100 = vmatprep.mubr.f32.mxu0 0.0
  %1101 = vmatmul.mubr.f32.gmra.mrb[0].mxu0 %v1021
  %v1102 = vpop.f32.mrb[0].mxu0
  %v1103 = vadd.f32 0.0, %v1102
  %v1104 = vpop.f32.mrb[0].mxu0
  %1105 = vmatprep.mubr.f32.mxu0 0.0
  %1106 = vmatmul.mubr.f32.gmra.mrb[0].mxu0 %v1024
  %v1107 = vpop.f32.mrb[0].mxu0
  %v1108 = vadd.f32 0.0, %v1107
  %v1109 = vpop.f32.mrb[0].mxu0
  %1110 = vdwg.mxu0
  %1115 = vrot.lane.b32.xlu0 %v1093, 96
  %v1116 = vpop.permute.xlu0 %1115
  %1117 = vrot.lane.b32.xlu0 %v1098, 96
  %v1118 = vpop.permute.xlu0 %1117
  %1119 = vrot.lane.b32.xlu0 %v1103, 96
  %v1120 = vpop.permute.xlu0 %1119
  %1121 = vrot.lane.b32.xlu0 %v1108, 96
  %v1122 = vpop.permute.xlu0 %1121
  %v1127 = vsel %vm619, %v1093, %v1116
  %v1128 = vsel %vm620, %v1098, %v1118
  %v1129 = vsel %vm621, %v1103, %v1120
  %v1130 = vsel %vm622, %v1108, %v1122
  %v1131 = vlaneseq
  %v1132 = vshrl.u32 %v1131, 7
  %v1133 = vsub.s32 0, %v1132
  %v1134 = vrot.slane %v953, %v1133
  %1136 = vrot.lane.b32.xlu0 %v1134, 96
  %v1137 = vpop.permute.xlu0 %1136
  %v1139 = vsel %vm619, %v1134, %v1137
  %v1140 = vsel %vm620, %v1134, %v1137
  %v1141 = vsel %vm621, %v1134, %v1137
  %v1142 = vsel %vm622, %v1134, %v1137
  %1143 = vmatprep.subr.mxu0 0.0
  %1144 = vmatpush1.msra.mxu0 %v1127
  %1145 = vmatprep.subr.mxu0 0.0
  %1146 = vmatpush1.msra.mxu0 %v1128
  %1147 = vmatprep.subr.mxu0 0.0
  %1148 = vmatpush1.msra.mxu0 %v1129
  %1149 = vmatprep.subr.mxu0 0.0
  %1150 = vmatpush1.msra.mxu0 %v1130
  %1151 = vmatprep.subr.mxu0 0.0
  %1152 = vmatpush1.msra.mxu0 0.0
  %1153 = vmatprep.subr.mxu0 0.0
  %1154 = vmatpush1.msra.mxu0 0.0
  %1155 = vmatprep.subr.mxu0 0.0
  %1156 = vmatpush1.msra.mxu0 0.0
  %1157 = vmatprep.subr.mxu0 0.0
  %1158 = vmatpush1.msra.mxu0 0.0
  %1159 = vmatprep.subr.mxu0 0.0
  %1160 = vmatpush1.msra.mxu0 0.0
  %1161 = vmatprep.subr.mxu0 0.0
  %1162 = vmatpush1.msra.mxu0 0.0
  %1163 = vmatprep.subr.mxu0 0.0
  %1164 = vmatpush1.msra.mxu0 0.0
  %1165 = vmatprep.subr.mxu0 0.0
  %1166 = vmatpush1.msra.mxu0 0.0
  %1167 = vmatprep.subr.mxu0 0.0
  %1168 = vmatpush1.msra.mxu0 0.0
  %1169 = vmatprep.subr.mxu0 0.0
  %1170 = vmatpush1.msra.mxu0 0.0
  %1171 = vmatprep.subr.mxu0 0.0
  %1172 = vmatpush1.msra.mxu0 0.0
  %1173 = vmatprep.subr.mxu0 0.0
  %1174 = vmatpush1.msra.mxu0 0.0
  %1175 = vmatprep.subr.mxu0 0.0
  %1176 = vmatpush1.msra.mxu0 0.0
  %1177 = vmatprep.subr.mxu0 0.0
  %1178 = vmatpush1.msra.mxu0 0.0
  %1179 = vmatprep.subr.mxu0 0.0
  %1180 = vmatpush1.msra.mxu0 0.0
  %1181 = vmatprep.subr.mxu0 0.0
  %1182 = vmatpush1.msra.mxu0 0.0
  %1183 = vmatprep.subr.mxu0 0.0
  %1184 = vmatpush1.msra.mxu0 0.0
  %1185 = vmatprep.subr.mxu0 0.0
  %1186 = vmatpush1.msra.mxu0 0.0
  %1187 = vmatprep.subr.mxu0 0.0
  %1188 = vmatpush1.msra.mxu0 0.0
  %1189 = vmatprep.subr.mxu0 0.0
  %1190 = vmatpush1.msra.mxu0 0.0
  %1191 = vmatprep.subr.mxu0 0.0
  %1192 = vmatpush1.msra.mxu0 0.0
  %1193 = vmatprep.subr.mxu0 0.0
  %1194 = vmatpush1.msra.mxu0 0.0
  %1195 = vmatprep.subr.mxu0 0.0
  %1196 = vmatpush1.msra.mxu0 0.0
  %1197 = vmatprep.subr.mxu0 0.0
  %1198 = vmatpush1.msra.mxu0 0.0
  %1199 = vmatprep.subr.mxu0 0.0
  %1200 = vmatpush1.msra.mxu0 0.0
  %1201 = vmatprep.subr.mxu0 0.0
  %1202 = vmatpush1.msra.mxu0 0.0
  %1203 = vmatprep.subr.mxu0 0.0
  %1204 = vmatpush1.msra.mxu0 0.0
  %1205 = vmatprep.subr.mxu0 0.0
  %1206 = vmatpush1.msra.mxu0 0.0
  %1207 = vmatprep.mubr.f32.mxu0 0.0
  %1208 = vmatmul.mubr.f32.gmra.mrb[0].mxu0 %v849
  %v1209 = vpop.f32.mrb[0].mxu0
  %v1210 = vadd.f32 %v1139, %v1209
  %v1211 = vpop.f32.mrb[0].mxu0
  %1212 = vmatprep.mubr.f32.mxu0 0.0
  %1213 = vmatmul.mubr.f32.gmra.mrb[0].mxu0 %v852
  %v1214 = vpop.f32.mrb[0].mxu0
  %v1215 = vadd.f32 %v1140, %v1214
  %v1216 = vpop.f32.mrb[0].mxu0
  %1217 = vmatprep.mubr.f32.mxu0 0.0
  %1218 = vmatmul.mubr.f32.gmra.mrb[0].mxu0 %v855
  %v1219 = vpop.f32.mrb[0].mxu0
  %v1220 = vadd.f32 %v1141, %v1219
  %v1221 = vpop.f32.mrb[0].mxu0
  %1222 = vmatprep.mubr.f32.mxu0 0.0
  %1223 = vmatmul.mubr.f32.gmra.mrb[0].mxu0 %v858
  %v1224 = vpop.f32.mrb[0].mxu0
  %v1225 = vadd.f32 %v1142, %v1224
  %v1226 = vpop.f32.mrb[0].mxu0
  %1227 = vdwg.mxu0
  %v1228 = vmax.f32 %v1210, 0.0
  %v1229 = vmax.f32 %v1215, 0.0
  %v1230 = vmax.f32 %v1220, 0.0
  %v1231 = vmax.f32 %v1225, 0.0
  %v1232 = vld [vmem:[%s5 + $0x6] sm:$0x1]
  %v1233 = vsel %vm219, %v1228, 0.0
  %v1234 = vsel %vm219, %v1229, 0.0
  %v1235 = vadd.f32 %v1233, %v1234
  %v1236 = vrot.slane %v1235, 4
  %v1237 = vadd.f32 %v1235, %v1236
  %v1238 = vrot.slane %v1237, 2
  %v1239 = vadd.f32 %v1237, %v1238
  %v1240 = vrot.slane %v1239, 1
  %v1241 = vadd.f32 %v1239, %v1240
  %v1242 = vmul.f32 %v1241, %v659
  %v1243 = vsub.f32 %v1228, %v1242
  %v1244 = vsub.f32 %v1229, %v1242
  %v1245 = vmul.f32 %v1243, %v1243
  %v1246 = vmul.f32 %v1244, %v1244
  %v1247 = vsel %vm219, %v1245, 0.0
  %v1248 = vsel %vm219, %v1246, 0.0
  %v1249 = vadd.f32 %v1247, %v1248
  %v1250 = vrot.slane %v1249, 4
  %v1251 = vadd.f32 %v1249, %v1250
  %v1252 = vrot.slane %v1251, 2
  %v1253 = vadd.f32 %v1251, %v1252
  %v1254 = vrot.slane %v1253, 1
  %v1255 = vadd.f32 %v1253, %v1254
  %v1256 = vmul.f32 %v1255, %v659
  %v1257 = vadd.f32 %v1256, 1e-05
  %v1258 = vrsqrt.pop %v1257
  %v1259 = vmul.f32 %v1243, %v1258
  %v1260 = vmul.f32 %v1244, %v1258
  %v1261 = vadd.f32 %v1259, 0.0001
  %v1262 = vadd.f32 %v1260, 0.0001
  %v1263 = vsel %vm219, %v1230, 0.0
  %v1264 = vsel %vm219, %v1231, 0.0
  %v1265 = vadd.f32 %v1263, %v1264
  %v1266 = vrot.slane %v1265, 4
  %v1267 = vadd.f32 %v1265, %v1266
  %v1268 = vrot.slane %v1267, 2
  %v1269 = vadd.f32 %v1267, %v1268
  %v1270 = vrot.slane %v1269, 1
  %v1271 = vadd.f32 %v1269, %v1270
  %v1272 = vmul.f32 %v1271, %v659
  %v1273 = vsub.f32 %v1230, %v1272
  %v1274 = vsub.f32 %v1231, %v1272
  %v1275 = vmul.f32 %v1273, %v1273
  %v1276 = vmul.f32 %v1274, %v1274
  %v1277 = vsel %vm219, %v1275, 0.0
  %v1278 = vsel %vm219, %v1276, 0.0
  %v1279 = vadd.f32 %v1277, %v1278
  %v1280 = vrot.slane %v1279, 4
  %v1281 = vadd.f32 %v1279, %v1280
  %v1282 = vrot.slane %v1281, 2
  %v1283 = vadd.f32 %v1281, %v1282
  %v1284 = vrot.slane %v1283, 1
  %v1285 = vadd.f32 %v1283, %v1284
  %v1286 = vmul.f32 %v1285, %v659
  %v1287 = vadd.f32 %v1286, 1e-05
  %v1288 = vrsqrt.pop %v1287
  %v1289 = vmul.f32 %v1273, %v1288
  %v1290 = vmul.f32 %v1274, %v1288
  %v1291 = vadd.f32 %v1289, 0.0001
  %v1292 = vadd.f32 %v1290, 0.0001
  %1297 = vrot.lane.b32.xlu0 %v949, 64
  %v1298 = vpop.permute.xlu0 %1297
  %1299 = vrot.lane.b32.xlu0 %v950, 64
  %v1300 = vpop.permute.xlu0 %1299
  %1301 = vrot.lane.b32.xlu0 %v951, 64
  %v1302 = vpop.permute.xlu0 %1301
  %1303 = vrot.lane.b32.xlu0 %v952, 64
  %v1304 = vpop.permute.xlu0 %1303
  %v1310 = vsel %vm219, %v1261, 0
  %v1313 = vsel %vm219, %v1262, 0
  %v1316 = vsel %vm219, %v1291, 0
  %v1319 = vsel %vm219, %v1292, 0
  %1321 = vmatprep.subr.mxu0 0.0
  %1322 = vmatpush1.msra.mxu0 %v1298
  %1323 = vmatprep.subr.mxu0 0.0
  %1324 = vmatpush1.msra.mxu0 %v1300
  %1325 = vmatprep.subr.mxu0 0.0
  %1326 = vmatpush1.msra.mxu0 %v1302
  %1327 = vmatprep.subr.mxu0 0.0
  %1328 = vmatpush1.msra.mxu0 %v1304
  %1329 = vmatprep.subr.mxu0 0.0
  %1330 = vmatpush1.msra.mxu0 0.0
  %1331 = vmatprep.subr.mxu0 0.0
  %1332 = vmatpush1.msra.mxu0 0.0
  %1333 = vmatprep.subr.mxu0 0.0
  %1334 = vmatpush1.msra.mxu0 0.0
  %1335 = vmatprep.subr.mxu0 0.0
  %1336 = vmatpush1.msra.mxu0 0.0
  %1337 = vmatprep.subr.mxu0 0.0
  %1338 = vmatpush1.msra.mxu0 0.0
  %1339 = vmatprep.subr.mxu0 0.0
  %1340 = vmatpush1.msra.mxu0 0.0
  %1341 = vmatprep.subr.mxu0 0.0
  %1342 = vmatpush1.msra.mxu0 0.0
  %1343 = vmatprep.subr.mxu0 0.0
  %1344 = vmatpush1.msra.mxu0 0.0
  %1345 = vmatprep.subr.mxu0 0.0
  %1346 = vmatpush1.msra.mxu0 0.0
  %1347 = vmatprep.subr.mxu0 0.0
  %1348 = vmatpush1.msra.mxu0 0.0
  %1349 = vmatprep.subr.mxu0 0.0
  %1350 = vmatpush1.msra.mxu0 0.0
  %1351 = vmatprep.subr.mxu0 0.0
  %1352 = vmatpush1.msra.mxu0 0.0
  %1353 = vmatprep.subr.mxu0 0.0
  %1354 = vmatpush1.msra.mxu0 0.0
  %1355 = vmatprep.subr.mxu0 0.0
  %1356 = vmatpush1.msra.mxu0 0.0
  %1357 = vmatprep.subr.mxu0 0.0
  %1358 = vmatpush1.msra.mxu0 0.0
  %1359 = vmatprep.subr.mxu0 0.0
  %1360 = vmatpush1.msra.mxu0 0.0
  %1361 = vmatprep.subr.mxu0 0.0
  %1362 = vmatpush1.msra.mxu0 0.0
  %1363 = vmatprep.subr.mxu0 0.0
  %1364 = vmatpush1.msra.mxu0 0.0
  %1365 = vmatprep.subr.mxu0 0.0
  %1366 = vmatpush1.msra.mxu0 0.0
  %1367 = vmatprep.subr.mxu0 0.0
  %1368 = vmatpush1.msra.mxu0 0.0
  %1369 = vmatprep.subr.mxu0 0.0
  %1370 = vmatpush1.msra.mxu0 0.0
  %1371 = vmatprep.subr.mxu0 0.0
  %1372 = vmatpush1.msra.mxu0 0.0
  %1373 = vmatprep.subr.mxu0 0.0
  %1374 = vmatpush1.msra.mxu0 0.0
  %1375 = vmatprep.subr.mxu0 0.0
  %1376 = vmatpush1.msra.mxu0 0.0
  %1377 = vmatprep.subr.mxu0 0.0
  %1378 = vmatpush1.msra.mxu0 0.0
  %1379 = vmatprep.subr.mxu0 0.0
  %1380 = vmatpush1.msra.mxu0 0.0
  %1381 = vmatprep.subr.mxu0 0.0
  %1382 = vmatpush1.msra.mxu0 0.0
  %1383 = vmatprep.subr.mxu0 0.0
  %1384 = vmatpush1.msra.mxu0 0.0
  %1385 = vmatprep.mubr.f32.mxu0 0.0
  %1386 = vmatmul.mubr.f32.gmra.mrb[0].mxu0 %v1310
  %v1387 = vpop.f32.mrb[0].mxu0
  %v1388 = vadd.f32 0.0, %v1387
  %v1389 = vpop.f32.mrb[0].mxu0
  %1390 = vmatprep.mubr.f32.mxu0 0.0
  %1391 = vmatmul.mubr.f32.gmra.mrb[0].mxu0 %v1313
  %v1392 = vpop.f32.mrb[0].mxu0
  %v1393 = vadd.f32 0.0, %v1392
  %v1394 = vpop.f32.mrb[0].mxu0
  %1395 = vmatprep.mubr.f32.mxu0 0.0
  %1396 = vmatmul.mubr.f32.gmra.mrb[0].mxu0 %v1316
  %v1397 = vpop.f32.mrb[0].mxu0
  %v1398 = vadd.f32 0.0, %v1397
  %v1399 = vpop.f32.mrb[0].mxu0
  %1400 = vmatprep.mubr.f32.mxu0 0.0
  %1401 = vmatmul.mubr.f32.gmra.mrb[0].mxu0 %v1319
  %v1402 = vpop.f32.mrb[0].mxu0
  %v1403 = vadd.f32 0.0, %v1402
  %v1404 = vpop.f32.mrb[0].mxu0
  %1405 = vdwg.mxu0
  %1410 = vrot.lane.b32.xlu0 %v1388, 96
  %v1411 = vpop.permute.xlu0 %1410
  %1412 = vrot.lane.b32.xlu0 %v1393, 96
  %v1413 = vpop.permute.xlu0 %1412
  %1414 = vrot.lane.b32.xlu0 %v1398, 96
  %v1415 = vpop.permute.xlu0 %1414
  %1416 = vrot.lane.b32.xlu0 %v1403, 96
  %v1417 = vpop.permute.xlu0 %1416
  %v1422 = vsel %vm619, %v1388, %v1411
  %v1423 = vsel %vm620, %v1393, %v1413
  %v1424 = vsel %vm621, %v1398, %v1415
  %v1425 = vsel %vm622, %v1403, %v1417
  %v1426 = vlaneseq
  %v1427 = vshrl.u32 %v1426, 7
  %v1428 = vsub.s32 0, %v1427
  %v1429 = vrot.slane %v1232, %v1428
  %1431 = vrot.lane.b32.xlu0 %v1429, 96
  %v1432 = vpop.permute.xlu0 %1431
  %v1434 = vsel %vm619, %v1429, %v1432
  %v1435 = vsel %vm620, %v1429, %v1432
  %v1436 = vsel %vm621, %v1429, %v1432
  %v1437 = vsel %vm622, %v1429, %v1432
  %1438 = vmatprep.subr.mxu0 0.0
  %1439 = vmatpush1.msra.mxu0 %v1422
  %1440 = vmatprep.subr.mxu0 0.0
  %1441 = vmatpush1.msra.mxu0 %v1423
  %1442 = vmatprep.subr.mxu0 0.0
  %1443 = vmatpush1.msra.mxu0 %v1424
  %1444 = vmatprep.subr.mxu0 0.0
  %1445 = vmatpush1.msra.mxu0 %v1425
  %1446 = vmatprep.subr.mxu0 0.0
  %1447 = vmatpush1.msra.mxu0 0.0
  %1448 = vmatprep.subr.mxu0 0.0
  %1449 = vmatpush1.msra.mxu0 0.0
  %1450 = vmatprep.subr.mxu0 0.0
  %1451 = vmatpush1.msra.mxu0 0.0
  %1452 = vmatprep.subr.mxu0 0.0
  %1453 = vmatpush1.msra.mxu0 0.0
  %1454 = vmatprep.subr.mxu0 0.0
  %1455 = vmatpush1.msra.mxu0 0.0
  %1456 = vmatprep.subr.mxu0 0.0
  %1457 = vmatpush1.msra.mxu0 0.0
  %1458 = vmatprep.subr.mxu0 0.0
  %1459 = vmatpush1.msra.mxu0 0.0
  %1460 = vmatprep.subr.mxu0 0.0
  %1461 = vmatpush1.msra.mxu0 0.0
  %1462 = vmatprep.subr.mxu0 0.0
  %1463 = vmatpush1.msra.mxu0 0.0
  %1464 = vmatprep.subr.mxu0 0.0
  %1465 = vmatpush1.msra.mxu0 0.0
  %1466 = vmatprep.subr.mxu0 0.0
  %1467 = vmatpush1.msra.mxu0 0.0
  %1468 = vmatprep.subr.mxu0 0.0
  %1469 = vmatpush1.msra.mxu0 0.0
  %1470 = vmatprep.subr.mxu0 0.0
  %1471 = vmatpush1.msra.mxu0 0.0
  %1472 = vmatprep.subr.mxu0 0.0
  %1473 = vmatpush1.msra.mxu0 0.0
  %1474 = vmatprep.subr.mxu0 0.0
  %1475 = vmatpush1.msra.mxu0 0.0
  %1476 = vmatprep.subr.mxu0 0.0
  %1477 = vmatpush1.msra.mxu0 0.0
  %1478 = vmatprep.subr.mxu0 0.0
  %1479 = vmatpush1.msra.mxu0 0.0
  %1480 = vmatprep.subr.mxu0 0.0
  %1481 = vmatpush1.msra.mxu0 0.0
  %1482 = vmatprep.subr.mxu0 0.0
  %1483 = vmatpush1.msra.mxu0 0.0
  %1484 = vmatprep.subr.mxu0 0.0
  %1485 = vmatpush1.msra.mxu0 0.0
  %1486 = vmatprep.subr.mxu0 0.0
  %1487 = vmatpush1.msra.mxu0 0.0
  %1488 = vmatprep.subr.mxu0 0.0
  %1489 = vmatpush1.msra.mxu0 0.0
  %1490 = vmatprep.subr.mxu0 0.0
  %1491 = vmatpush1.msra.mxu0 0.0
  %1492 = vmatprep.subr.mxu0 0.0
  %1493 = vmatpush1.msra.mxu0 0.0
  %1494 = vmatprep.subr.mxu0 0.0
  %1495 = vmatpush1.msra.mxu0 0.0
  %1496 = vmatprep.subr.mxu0 0.0
  %1497 = vmatpush1.msra.mxu0 0.0
  %1498 = vmatprep.subr.mxu0 0.0
  %1499 = vmatpush1.msra.mxu0 0.0
  %1500 = vmatprep.subr.mxu0 0.0
  %1501 = vmatpush1.msra.mxu0 0.0
  %1502 = vmatprep.mubr.f32.mxu0 0.0
  %1503 = vmatmul.mubr.f32.gmra.mrb[0].mxu0 %v849
  %v1504 = vpop.f32.mrb[0].mxu0
  %v1505 = vadd.f32 %v1434, %v1504
  %v1506 = vpop.f32.mrb[0].mxu0
  %1507 = vmatprep.mubr.f32.mxu0 0.0
  %1508 = vmatmul.mubr.f32.gmra.mrb[0].mxu0 %v852
  %v1509 = vpop.f32.mrb[0].mxu0
  %v1510 = vadd.f32 %v1435, %v1509
  %v1511 = vpop.f32.mrb[0].mxu0
  %1512 = vmatprep.mubr.f32.mxu0 0.0
  %1513 = vmatmul.mubr.f32.gmra.mrb[0].mxu0 %v855
  %v1514 = vpop.f32.mrb[0].mxu0
  %v1515 = vadd.f32 %v1436, %v1514
  %v1516 = vpop.f32.mrb[0].mxu0
  %1517 = vmatprep.mubr.f32.mxu0 0.0
  %1518 = vmatmul.mubr.f32.gmra.mrb[0].mxu0 %v858
  %v1519 = vpop.f32.mrb[0].mxu0
  %v1520 = vadd.f32 %v1437, %v1519
  %v1521 = vpop.f32.mrb[0].mxu0
  %1522 = vdwg.mxu0
  %v1523 = vmax.f32 %v1505, 0.0
  %v1524 = vmax.f32 %v1510, 0.0
  %v1525 = vmax.f32 %v1515, 0.0
  %v1526 = vmax.f32 %v1520, 0.0
  %v1527 = vlaneseq
  %v1528 = vshrl.u32 %v1527, 7
  %v1529 = vsub.s32 0, %v1528
  %v1530 = vrot.slane %v30, %v1529
  %vm1531 = vcmp.eq.s32.totalorder %v172, %v1530
  %v1532 = vsel %vm1531, 1, 0
  %v1533 = vcvt.s32.f32 %v1532
  %v1535 = vsel %vm200, %v1533, 0
  %1537 = vmatprep.subr.mxu0 0.0
  %1538 = vmatpush1.msra.mxu0 %v1523
  %1539 = vmatprep.subr.mxu0 0.0
  %1540 = vmatpush1.msra.mxu0 %v1524
  %1541 = vmatprep.subr.mxu0 0.0
  %1542 = vmatpush1.msra.mxu0 0.0
  %1543 = vmatprep.subr.mxu0 0.0
  %1544 = vmatpush1.msra.mxu0 0.0
  %1545 = vmatprep.subr.mxu0 0.0
  %1546 = vmatpush1.msra.mxu0 0.0
  %1547 = vmatprep.subr.mxu0 0.0
  %1548 = vmatpush1.msra.mxu0 0.0
  %1549 = vmatprep.subr.mxu0 0.0
  %1550 = vmatpush1.msra.mxu0 0.0
  %1551 = vmatprep.subr.mxu0 0.0
  %1552 = vmatpush1.msra.mxu0 0.0
  %1553 = vmatprep.subr.mxu0 0.0
  %1554 = vmatpush1.msra.mxu0 0.0
  %1555 = vmatprep.subr.mxu0 0.0
  %1556 = vmatpush1.msra.mxu0 0.0
  %1557 = vmatprep.subr.mxu0 0.0
  %1558 = vmatpush1.msra.mxu0 0.0
  %1559 = vmatprep.subr.mxu0 0.0
  %1560 = vmatpush1.msra.mxu0 0.0
  %1561 = vmatprep.subr.mxu0 0.0
  %1562 = vmatpush1.msra.mxu0 0.0
  %1563 = vmatprep.subr.mxu0 0.0
  %1564 = vmatpush1.msra.mxu0 0.0
  %1565 = vmatprep.subr.mxu0 0.0
  %1566 = vmatpush1.msra.mxu0 0.0
  %1567 = vmatprep.subr.mxu0 0.0
  %1568 = vmatpush1.msra.mxu0 0.0
  %1569 = vmatprep.subr.mxu0 0.0
  %1570 = vmatpush1.msra.mxu0 0.0
  %1571 = vmatprep.subr.mxu0 0.0
  %1572 = vmatpush1.msra.mxu0 0.0
  %1573 = vmatprep.subr.mxu0 0.0
  %1574 = vmatpush1.msra.mxu0 0.0
  %1575 = vmatprep.subr.mxu0 0.0
  %1576 = vmatpush1.msra.mxu0 0.0
  %1577 = vmatprep.subr.mxu0 0.0
  %1578 = vmatpush1.msra.mxu0 0.0
  %1579 = vmatprep.subr.mxu0 0.0
  %1580 = vmatpush1.msra.mxu0 0.0
  %1581 = vmatprep.subr.mxu0 0.0
  %1582 = vmatpush1.msra.mxu0 0.0
  %1583 = vmatprep.subr.mxu0 0.0
  %1584 = vmatpush1.msra.mxu0 0.0
  %1585 = vmatprep.subr.mxu0 0.0
  %1586 = vmatpush1.msra.mxu0 0.0
  %1587 = vmatprep.subr.mxu0 0.0
  %1588 = vmatpush1.msra.mxu0 0.0
  %1589 = vmatprep.subr.mxu0 0.0
  %1590 = vmatpush1.msra.mxu0 0.0
  %1591 = vmatprep.subr.mxu0 0.0
  %1592 = vmatpush1.msra.mxu0 0.0
  %1593 = vmatprep.subr.mxu0 0.0
  %1594 = vmatpush1.msra.mxu0 0.0
  %1595 = vmatprep.subr.mxu0 0.0
  %1596 = vmatpush1.msra.mxu0 0.0
  %1597 = vmatprep.subr.mxu0 0.0
  %1598 = vmatpush1.msra.mxu0 0.0
  %1599 = vmatprep.subr.mxu0 0.0
  %1600 = vmatpush1.msra.mxu0 0.0
  %1601 = vmatprep.mubr.f32.mxu0 0.0
  %1602 = vmatmul.mubr.f32.gmra.mrb[0].mxu0 %v1535
  %v1603 = vpop.f32.mrb[0].mxu0
  %v1604 = vadd.f32 0.0, %v1603
  %v1605 = vpop.f32.mrb[0].mxu0
  %1606 = vdwg.mxu0
  %1607 = vmatprep.subr.mxu0 0.0
  %1608 = vmatpush1.msra.mxu0 %v1525
  %1609 = vmatprep.subr.mxu0 0.0
  %1610 = vmatpush1.msra.mxu0 %v1526
  %1611 = vmatprep.subr.mxu0 0.0
  %1612 = vmatpush1.msra.mxu0 0.0
  %1613 = vmatprep.subr.mxu0 0.0
  %1614 = vmatpush1.msra.mxu0 0.0
  %1615 = vmatprep.subr.mxu0 0.0
  %1616 = vmatpush1.msra.mxu0 0.0
  %1617 = vmatprep.subr.mxu0 0.0
  %1618 = vmatpush1.msra.mxu0 0.0
  %1619 = vmatprep.subr.mxu0 0.0
  %1620 = vmatpush1.msra.mxu0 0.0
  %1621 = vmatprep.subr.mxu0 0.0
  %1622 = vmatpush1.msra.mxu0 0.0
  %1623 = vmatprep.subr.mxu0 0.0
  %1624 = vmatpush1.msra.mxu0 0.0
  %1625 = vmatprep.subr.mxu0 0.0
  %1626 = vmatpush1.msra.mxu0 0.0
  %1627 = vmatprep.subr.mxu0 0.0
  %1628 = vmatpush1.msra.mxu0 0.0
  %1629 = vmatprep.subr.mxu0 0.0
  %1630 = vmatpush1.msra.mxu0 0.0
  %1631 = vmatprep.subr.mxu0 0.0
  %1632 = vmatpush1.msra.mxu0 0.0
  %1633 = vmatprep.subr.mxu0 0.0
  %1634 = vmatpush1.msra.mxu0 0.0
  %1635 = vmatprep.subr.mxu0 0.0
  %1636 = vmatpush1.msra.mxu0 0.0
  %1637 = vmatprep.subr.mxu0 0.0
  %1638 = vmatpush1.msra.mxu0 0.0
  %1639 = vmatprep.subr.mxu0 0.0
  %1640 = vmatpush1.msra.mxu0 0.0
  %1641 = vmatprep.subr.mxu0 0.0
  %1642 = vmatpush1.msra.mxu0 0.0
  %1643 = vmatprep.subr.mxu0 0.0
  %1644 = vmatpush1.msra.mxu0 0.0
  %1645 = vmatprep.subr.mxu0 0.0
  %1646 = vmatpush1.msra.mxu0 0.0
  %1647 = vmatprep.subr.mxu0 0.0
  %1648 = vmatpush1.msra.mxu0 0.0
  %1649 = vmatprep.subr.mxu0 0.0
  %1650 = vmatpush1.msra.mxu0 0.0
  %1651 = vmatprep.subr.mxu0 0.0
  %1652 = vmatpush1.msra.mxu0 0.0
  %1653 = vmatprep.subr.mxu0 0.0
  %1654 = vmatpush1.msra.mxu0 0.0
  %1655 = vmatprep.subr.mxu0 0.0
  %1656 = vmatpush1.msra.mxu0 0.0
  %1657 = vmatprep.subr.mxu0 0.0
  %1658 = vmatpush1.msra.mxu0 0.0
  %1659 = vmatprep.subr.mxu0 0.0
  %1660 = vmatpush1.msra.mxu0 0.0
  %1661 = vmatprep.subr.mxu0 0.0
  %1662 = vmatpush1.msra.mxu0 0.0
  %1663 = vmatprep.subr.mxu0 0.0
  %1664 = vmatpush1.msra.mxu0 0.0
  %1665 = vmatprep.subr.mxu0 0.0
  %1666 = vmatpush1.msra.mxu0 0.0
  %1667 = vmatprep.subr.mxu0 0.0
  %1668 = vmatpush1.msra.mxu0 0.0
  %1669 = vmatprep.subr.mxu0 0.0
  %1670 = vmatpush1.msra.mxu0 0.0
  %1671 = vmatprep.mubr.f32.mxu0 0.0
  %1672 = vmatmul.mubr.f32.gmra.mrb[0].mxu0 %v1535
  %v1673 = vpop.f32.mrb[0].mxu0
  %v1674 = vadd.f32 0.0, %v1673
  %v1675 = vpop.f32.mrb[0].mxu0
  %1676 = vdwg.mxu0
  %v1677 = vadd.f32 %v1604, %v1674
  %1679 = vrot.lane.b32.xlu0 %v1674, 32
  %v1680 = vpop.permute.xlu0 %1679
  %1683 = vrot.lane.b32.xlu0 %v1677, 64
  %v1684 = vpop.permute.xlu0 %1683
  %v1686 = vsel %vm219, %v1604, %v1680
  %vm1687 = vcmask 523264
  %v1688 = vsel %vm1687, %v1686, %v1684
  %vm1689 = vcmask 779264
  %v1690 = vsel %vm1689, %v1688, 0.0
  %v1691 = vrot.slane %v1690, 4
  %v1692 = vadd.f32 %v1690, %v1691
  %v1693 = vrot.slane %v1692, 2
  %v1694 = vadd.f32 %v1692, %v1693
  %v1695 = vrot.slane %v1694, 1
  %v1696 = vadd.f32 %v1694, %v1695
  %v1697 = vrcp.pop 2.0
  %v1698 = vmul.f32 %v1696, %v1697
  %v1699 = vsub.f32 %v1688, %v1698
  %v1700 = vmul.f32 %v1699, %v1699
  %v1701 = vsel %vm1689, %v1700, 0.0
  %v1702 = vrot.slane %v1701, 4
  %v1703 = vadd.f32 %v1701, %v1702
  %v1704 = vrot.slane %v1703, 2
  %v1705 = vadd.f32 %v1703, %v1704
  %v1706 = vrot.slane %v1705, 1
  %v1707 = vadd.f32 %v1705, %v1706
  %v1708 = vmul.f32 %v1707, %v1697
  %v1709 = vadd.f32 %v1708, 1e-05
  %v1710 = vrsqrt.pop %v1709
  %v1711 = vmul.f32 %v1699, %v1710
  %v1712 = vadd.f32 %v1711, 0.0001
  %v1713 = vld [vmem:[%s4] sm:$0xff]
  %v1714 = vld [vmem:[%s4 + $0x8] sm:$0xff]
  %v1715 = vld [vmem:[%s4 + $0x10] sm:$0xff]
  %v1716 = vld [vmem:[%s4 + $0x18] sm:$0xff]
  %v1717 = vld [vmem:[%s4 + $0x20] sm:$0xff]
  %v1718 = vld [vmem:[%s4 + $0x28] sm:$0xff]
  %v1719 = vld [vmem:[%s4 + $0x30] sm:$0xff]
  %v1720 = vld [vmem:[%s4 + $0x38] sm:$0xff]
  %v1721 = vld [vmem:[%s4 + $0x40] sm:$0xff]
  %v1722 = vld [vmem:[%s4 + $0x48] sm:$0xff]
  %v1723 = vld [vmem:[%s4 + $0x50] sm:$0xff]
  %v1724 = vld [vmem:[%s4 + $0x58] sm:$0xff]
  %v1725 = vld [vmem:[%s5 + $0x7] sm:$0x1]
  %v1726 = vlaneseq
  %v1727 = vshrl.u32 %v1726, 7
  %v1728 = vsub.s32 0, %v1727
  %v1729 = vrot.slane %v1725, %v1728
  %vm1730 = vcmask 785408
  %v1732 = vsel %vm1730, %v1712, 0
  %1734 = vmatprep.subr.mxu0 0.0
  %1735 = vmatpush1.msra.mxu0 %v1713
  %1736 = vmatprep.subr.mxu0 0.0
  %1737 = vmatpush1.msra.mxu0 %v1714
  %1738 = vmatprep.subr.mxu0 0.0
  %1739 = vmatpush1.msra.mxu0 %v1715
  %1740 = vmatprep.subr.mxu0 0.0
  %1741 = vmatpush1.msra.mxu0 %v1716
  %1742 = vmatprep.subr.mxu0 0.0
  %1743 = vmatpush1.msra.mxu0 %v1717
  %1744 = vmatprep.subr.mxu0 0.0
  %1745 = vmatpush1.msra.mxu0 %v1718
  %1746 = vmatprep.subr.mxu0 0.0
  %1747 = vmatpush1.msra.mxu0 %v1719
  %1748 = vmatprep.subr.mxu0 0.0
  %1749 = vmatpush1.msra.mxu0 %v1720
  %1750 = vmatprep.subr.mxu0 0.0
  %1751 = vmatpush1.msra.mxu0 %v1721
  %1752 = vmatprep.subr.mxu0 0.0
  %1753 = vmatpush1.msra.mxu0 %v1722
  %1754 = vmatprep.subr.mxu0 0.0
  %1755 = vmatpush1.msra.mxu0 %v1723
  %1756 = vmatprep.subr.mxu0 0.0
  %1757 = vmatpush1.msra.mxu0 %v1724
  %1758 = vmatprep.subr.mxu0 0.0
  %1759 = vmatpush1.msra.mxu0 0.0
  %1760 = vmatprep.subr.mxu0 0.0
  %1761 = vmatpush1.msra.mxu0 0.0
  %1762 = vmatprep.subr.mxu0 0.0
  %1763 = vmatpush1.msra.mxu0 0.0
  %1764 = vmatprep.subr.mxu0 0.0
  %1765 = vmatpush1.msra.mxu0 0.0
  %1766 = vmatprep.subr.mxu0 0.0
  %1767 = vmatpush1.msra.mxu0 0.0
  %1768 = vmatprep.subr.mxu0 0.0
  %1769 = vmatpush1.msra.mxu0 0.0
  %1770 = vmatprep.subr.mxu0 0.0
  %1771 = vmatpush1.msra.mxu0 0.0
  %1772 = vmatprep.subr.mxu0 0.0
  %1773 = vmatpush1.msra.mxu0 0.0
  %1774 = vmatprep.subr.mxu0 0.0
  %1775 = vmatpush1.msra.mxu0 0.0
  %1776 = vmatprep.subr.mxu0 0.0
  %1777 = vmatpush1.msra.mxu0 0.0
  %1778 = vmatprep.subr.mxu0 0.0
  %1779 = vmatpush1.msra.mxu0 0.0
  %1780 = vmatprep.subr.mxu0 0.0
  %1781 = vmatpush1.msra.mxu0 0.0
  %1782 = vmatprep.subr.mxu0 0.0
  %1783 = vmatpush1.msra.mxu0 0.0
  %1784 = vmatprep.subr.mxu0 0.0
  %1785 = vmatpush1.msra.mxu0 0.0
  %1786 = vmatprep.subr.mxu0 0.0
  %1787 = vmatpush1.msra.mxu0 0.0
  %1788 = vmatprep.subr.mxu0 0.0
  %1789 = vmatpush1.msra.mxu0 0.0
  %1790 = vmatprep.subr.mxu0 0.0
  %1791 = vmatpush1.msra.mxu0 0.0
  %1792 = vmatprep.subr.mxu0 0.0
  %1793 = vmatpush1.msra.mxu0 0.0
  %1794 = vmatprep.subr.mxu0 0.0
  %1795 = vmatpush1.msra.mxu0 0.0
  %1796 = vmatprep.subr.mxu0 0.0
  %1797 = vmatpush1.msra.mxu0 0.0
  %1798 = vmatprep.mubr.f32.mxu0 0.0
  %1799 = vmatmul.mubr.f32.gmra.mrb[0].mxu0 %v1732
  %v1800 = vpop.f32.mrb[0].mxu0
  %v1801 = vadd.f32 %v1729, %v1800
  %v1802 = vpop.f32.mrb[0].mxu0
  %1803 = vdwg.mxu0
  %v1804 = vmax.f32 %v1801, 0.0
  %v1805 = vsel %vm1689, %v1804, 0.0
  %v1806 = vrot.slane %v1805, 4
  %v1807 = vadd.f32 %v1805, %v1806
  %v1808 = vrot.slane %v1807, 2
  %v1809 = vadd.f32 %v1807, %v1808
  %v1810 = vrot.slane %v1809, 1
  %v1811 = vadd.f32 %v1809, %v1810
  %v1812 = vmul.f32 %v1811, %v1697
  %v1813 = vsub.f32 %v1804, %v1812
  %v1814 = vmul.f32 %v1813, %v1813
  %v1815 = vsel %vm1689, %v1814, 0.0
  %v1816 = vrot.slane %v1815, 4
  %v1817 = vadd.f32 %v1815, %v1816
  %v1818 = vrot.slane %v1817, 2
  %v1819 = vadd.f32 %v1817, %v1818
  %v1820 = vrot.slane %v1819, 1
  %v1821 = vadd.f32 %v1819, %v1820
  %v1822 = vmul.f32 %v1821, %v1697
  %v1823 = vadd.f32 %v1822, 1e-05
  %v1824 = vrsqrt.pop %v1823
  %v1825 = vmul.f32 %v1813, %v1824
  %v1826 = vadd.f32 %v1825, 0.0001
  %v1827 = vld [vmem:[%s5 + $0x8] sm:$0x1]
  %v1828 = vlaneseq
  %v1829 = vshrl.u32 %v1828, 7
  %v1830 = vsub.s32 0, %v1829
  %v1831 = vrot.slane %v1827, %v1830
  %1844 = vrot.lane.b32.xlu0 %v1713, 32
  %v1845 = vpop.permute.xlu0 %1844
  %1846 = vrot.lane.b32.xlu0 %v1714, 32
  %v1847 = vpop.permute.xlu0 %1846
  %1848 = vrot.lane.b32.xlu0 %v1715, 32
  %v1849 = vpop.permute.xlu0 %1848
  %1850 = vrot.lane.b32.xlu0 %v1716, 32
  %v1851 = vpop.permute.xlu0 %1850
  %1852 = vrot.lane.b32.xlu0 %v1717, 32
  %v1853 = vpop.permute.xlu0 %1852
  %1854 = vrot.lane.b32.xlu0 %v1718, 32
  %v1855 = vpop.permute.xlu0 %1854
  %1856 = vrot.lane.b32.xlu0 %v1719, 32
  %v1857 = vpop.permute.xlu0 %1856
  %1858 = vrot.lane.b32.xlu0 %v1720, 32
  %v1859 = vpop.permute.xlu0 %1858
  %1860 = vrot.lane.b32.xlu0 %v1721, 32
  %v1861 = vpop.permute.xlu0 %1860
  %1862 = vrot.lane.b32.xlu0 %v1722, 32
  %v1863 = vpop.permute.xlu0 %1862
  %1864 = vrot.lane.b32.xlu0 %v1723, 32
  %v1865 = vpop.permute.xlu0 %1864
  %1866 = vrot.lane.b32.xlu0 %v1724, 32
  %v1867 = vpop.permute.xlu0 %1866
  %v1881 = vsel %vm1730, %v1826, 0
  %1883 = vmatprep.subr.mxu0 0.0
  %1884 = vmatpush1.msra.mxu0 %v1845
  %1885 = vmatprep.subr.mxu0 0.0
  %1886 = vmatpush1.msra.mxu0 %v1847
  %1887 = vmatprep.subr.mxu0 0.0
  %1888 = vmatpush1.msra.mxu0 %v1849
  %1889 = vmatprep.subr.mxu0 0.0
  %1890 = vmatpush1.msra.mxu0 %v1851
  %1891 = vmatprep.subr.mxu0 0.0
  %1892 = vmatpush1.msra.mxu0 %v1853
  %1893 = vmatprep.subr.mxu0 0.0
  %1894 = vmatpush1.msra.mxu0 %v1855
  %1895 = vmatprep.subr.mxu0 0.0
  %1896 = vmatpush1.msra.mxu0 %v1857
  %1897 = vmatprep.subr.mxu0 0.0
  %1898 = vmatpush1.msra.mxu0 %v1859
  %1899 = vmatprep.subr.mxu0 0.0
  %1900 = vmatpush1.msra.mxu0 %v1861
  %1901 = vmatprep.subr.mxu0 0.0
  %1902 = vmatpush1.msra.mxu0 %v1863
  %1903 = vmatprep.subr.mxu0 0.0
  %1904 = vmatpush1.msra.mxu0 %v1865
  %1905 = vmatprep.subr.mxu0 0.0
  %1906 = vmatpush1.msra.mxu0 %v1867
  %1907 = vmatprep.subr.mxu0 0.0
  %1908 = vmatpush1.msra.mxu0 0.0
  %1909 = vmatprep.subr.mxu0 0.0
  %1910 = vmatpush1.msra.mxu0 0.0
  %1911 = vmatprep.subr.mxu0 0.0
  %1912 = vmatpush1.msra.mxu0 0.0
  %1913 = vmatprep.subr.mxu0 0.0
  %1914 = vmatpush1.msra.mxu0 0.0
  %1915 = vmatprep.subr.mxu0 0.0
  %1916 = vmatpush1.msra.mxu0 0.0
  %1917 = vmatprep.subr.mxu0 0.0
  %1918 = vmatpush1.msra.mxu0 0.0
  %1919 = vmatprep.subr.mxu0 0.0
  %1920 = vmatpush1.msra.mxu0 0.0
  %1921 = vmatprep.subr.mxu0 0.0
  %1922 = vmatpush1.msra.mxu0 0.0
  %1923 = vmatprep.subr.mxu0 0.0
  %1924 = vmatpush1.msra.mxu0 0.0
  %1925 = vmatprep.subr.mxu0 0.0
  %1926 = vmatpush1.msra.mxu0 0.0
  %1927 = vmatprep.subr.mxu0 0.0
  %1928 = vmatpush1.msra.mxu0 0.0
  %1929 = vmatprep.subr.mxu0 0.0
  %1930 = vmatpush1.msra.mxu0 0.0
  %1931 = vmatprep.subr.mxu0 0.0
  %1932 = vmatpush1.msra.mxu0 0.0
  %1933 = vmatprep.subr.mxu0 0.0
  %1934 = vmatpush1.msra.mxu0 0.0
  %1935 = vmatprep.subr.mxu0 0.0
  %1936 = vmatpush1.msra.mxu0 0.0
  %1937 = vmatprep.subr.mxu0 0.0
  %1938 = vmatpush1.msra.mxu0 0.0
  %1939 = vmatprep.subr.mxu0 0.0
  %1940 = vmatpush1.msra.mxu0 0.0
  %1941 = vmatprep.subr.mxu0 0.0
  %1942 = vmatpush1.msra.mxu0 0.0
  %1943 = vmatprep.subr.mxu0 0.0
  %1944 = vmatpush1.msra.mxu0 0.0
  %1945 = vmatprep.subr.mxu0 0.0
  %1946 = vmatpush1.msra.mxu0 0.0
  %1947 = vmatprep.mubr.f32.mxu0 0.0
  %1948 = vmatmul.mubr.f32.gmra.mrb[0].mxu0 %v1881
  %v1949 = vpop.f32.mrb[0].mxu0
  %v1950 = vadd.f32 %v1831, %v1949
  %v1951 = vpop.f32.mrb[0].mxu0
  %1952 = vdwg.mxu0
  %vm1953 = vcmask 25600
  %v1954 = vsel %vm1953, %v1950, -inf
  %1955 = vmax.xlane.f32.xlu0 %v1954
  %v1956 = vpop.xlane.xlu0 %1955
  %v1957 = vsub.f32 %v1950, %v1956
  %v1958 = vmul.f32 %v1957, 1.442695
  %v1959 = vpow.pop %v1958
  %v1960 = vsel %vm1953, %v1959, 0.0
  %1961 = vadd.xlane.f32.xlu0 %v1960
  %v1962 = vpop.xlane.xlu0 %1961
  %v1963 = vlog2.pop %v1962
  %v1964 = vmul.f32 %v1963, 0.6931472
  %v1965 = vsub.f32 %v1957, %v1964
  %vm1966 = vcmask 58400
  %v1967 = vsel %vm1966, %v1950, -inf
  %1968 = vmax.xlane.f32.xlu0 %v1967
  %v1969 = vpop.xlane.xlu0 %1968
  %v1970 = vsub.f32 %v1950, %v1969
  %v1971 = vmul.f32 %v1970, 1.442695
  %v1972 = vpow.pop %v1971
  %1974 = vrot.lane.b32.xlu0 %v1972, 124
  %v1975 = vpop.permute.xlu0 %1974
  %v1977 = vsel %vm1953, %v1975, 0.0
  %1978 = vadd.xlane.f32.xlu0 %v1977
  %v1979 = vpop.xlane.xlu0 %1978
  %v1980 = vlog2.pop %v1979
  %v1981 = vmul.f32 %v1980, 0.6931472
  %v1982 = vsub.f32 %v1970, %v1981
  %vm1983 = vcmask 91200
  %v1984 = vsel %vm1983, %v1950, -inf
  %1985 = vmax.xlane.f32.xlu0 %v1984
  %v1986 = vpop.xlane.xlu0 %1985
  %v1987 = vsub.f32 %v1950, %v1986
  %v1988 = vmul.f32 %v1987, 1.442695
  %v1989 = vpow.pop %v1988
  %1991 = vrot.lane.b32.xlu0 %v1989, 120
  %v1992 = vpop.permute.xlu0 %1991
  %v1994 = vsel %vm1953, %v1992, 0.0
  %1995 = vadd.xlane.f32.xlu0 %v1994
  %v1996 = vpop.xlane.xlu0 %1995
  %v1997 = vlog2.pop %v1996
  %v1998 = vmul.f32 %v1997, 0.6931472
  %v1999 = vsub.f32 %v1987, %v1998
  %vm2000 = vcmask 31744
  %v2001 = vsel %vm2000, %v1965, %v1982
  %v2002 = vsel %vm37, %v2001, %v1999
  %vm2003 = vcmask 97280
  %v2004 = vsel %vm2003, %v2002, 0.0
  %2005 = vst [vmem:[%s6] sm:$0x3] %v2004
  // Predicated region
  $region26: #{causal_gcn_begin_forward.1} parent=0 // pred_check
    _
  $region27: #{causal_gcn_begin_forward.1} parent=0 // pred_check_branch
    %2007 = sbr.rel (0) target = $region29
  $region28: #{causal_gcn_begin_forward.1} parent=0 // pred_region
    _
  $region29: #{causal_gcn_begin_forward.1} parent=0 // pred_fallthru
    _
  // Predicated region
  $region30: #{causal_gcn_begin_forward.1} parent=0 // pred_check
    _
  $region31: #{causal_gcn_begin_forward.1} parent=0 // pred_check_branch
    %2009 = sbr.rel (0) target = $region33
  $region32: #{causal_gcn_begin_forward.1} parent=0 // pred_region
    _
  $region33: #{causal_gcn_begin_forward.1} parent=0 // pred_fallthru
    _

</llo_original>
